<compile_context>
chip_gen: v6e
topology: v6e:2x2x1
jax: 0.10.0
libtpu: 0.0.40
codegen_flags: <defaults>
</compile_context>

<pallas_src>
import functools
import math

import jax
import jax.numpy as jnp
from jax.experimental import pallas as pl
from jax.experimental.pallas import tpu as pltpu


def _cdiv(a, b):
    return -(-a // b)


def _round_up(a, m):
    return _cdiv(a, m) * m


def _dice_plus_partial_kernel(x_ref, y_ref, out_ref, *, C, S_rows, in_rows, n_s, HW):
    """One grid step = one (core-chunk, batch-sample, spatial-block).

    x_ref:   (1, C, S_rows, 128) probabilities, native dtype (widened in-register).
    y_ref:   (1, 1, S_rows, 128) integer label map, native dtype.
    out_ref: (1, 1, 3*C, 8, 128) f32 per-lane partial sums, resident across the
             spatial axis: rows [0,C) = tp, [C,2C) = sum(x), [2C,3C) = label counts.
    """
    nc = pl.program_id(0)
    s = pl.program_id(2)
    n_chunks = S_rows // in_rows
    g = in_rows // 8

    @pl.when(s == 0)
    def _init():
        out_ref[...] = jnp.zeros_like(out_ref)

    blk = nc * n_s + s                       # unclamped spatial block id
    start = blk * (S_rows * 128)             # global flat index of this block's 1st element

    def make_body(masked):
        def body(i, carry):
            r0 = pl.multiple_of(i * in_rows, in_rows)
            y = y_ref[0, 0, pl.ds(r0, in_rows), :].astype(jnp.int32)   # (in_rows, 128)
            if masked:
                ridx = jax.lax.broadcasted_iota(jnp.int32, (in_rows, 128), 0)
                lidx = jax.lax.broadcasted_iota(jnp.int32, (in_rows, 128), 1)
                valid = (start + (r0 + ridx) * 128 + lidx) < HW
            for c in range(C):               # C is small and static
                xc = x_ref[0, c, pl.ds(r0, in_rows), :].astype(jnp.float32)
                m = y == c                   # scalar-channel compare on dense vregs
                if masked:
                    m = jnp.logical_and(m, valid)
                    xs = jnp.where(valid, xc, 0.0)
                else:
                    xs = xc
                tp_t = jnp.where(m, xc, 0.0)
                ct_t = jnp.where(m, 1.0, 0.0)
                # Sublane-group sums: pure vreg adds; cross-lane reduce deferred to JAX.
                out_ref[0, 0, 0 * C + c] += tp_t.reshape(g, 8, 128).sum(axis=0)
                out_ref[0, 0, 1 * C + c] += xs.reshape(g, 8, 128).sum(axis=0)
                out_ref[0, 0, 2 * C + c] += ct_t.reshape(g, 8, 128).sum(axis=0)
            return carry
        return body

    is_full = start + S_rows * 128 <= HW     # block holds only real (unpadded) elements

    @pl.when(is_full)
    def _fast():
        jax.lax.fori_loop(0, n_chunks, make_body(False), 0)

    @pl.when(jnp.logical_not(is_full))
    def _ragged():                           # only tail / idle blocks pay for masking
        jax.lax.fori_loop(0, n_chunks, make_body(True), 0)


def soft_dice_plus_loss(x, y, *, gamma=2.0, smooth=1.0, num_core_chunks=2,
                        max_rows_per_step=2048):
    """Pallas implementation of SoftDicePlusLoss().forward(x, y) with module defaults.

    x: (B, C, *spatial) float probabilities (apply_nonlin=None default).
    y: (B, *spatial) or (B, 1, *spatial) integer label map.
    """
    # TODO(synk): one-hot / soft gt (y.shape == x.shape), loss_mask, clip_tp and the
    # ddp+batch_dice all-gather paths are not implemented (module defaults never hit them).
    B, C = int(x.shape[0]), int(x.shape[1])
    HW = math.prod(int(d) for d in x.shape[2:])

    xf = x.reshape(B, C, HW)                 # native dtype all the way to the DMA
    yf = y.reshape(B, 1, HW)
    if not jnp.issubdtype(yf.dtype, jnp.integer):
        yf = yf.astype(jnp.int32)

    # Lane-dense view: HW -> (R, 128). Free (metadata-only) when HW is a multiple of 128
    # and >= 1024; otherwise a small pad-to-128 copy (ragged / toy inputs only). Padded
    # elements are masked out in-kernel, so their values never matter.
    hw_pad = max(_round_up(HW, 128), 8 * 128)
    if hw_pad != HW:
        xf = jnp.pad(xf, ((0, 0), (0, 0), (0, hw_pad - HW)))
        yf = jnp.pad(yf, ((0, 0), (0, 0), (0, hw_pad - HW)))
    R = hw_pad // 128
    x4 = xf.reshape(B, C, R, 128)
    y4 = yf.reshape(B, 1, R, 128)

    x_b = jnp.dtype(x4.dtype).itemsize
    y_b = jnp.dtype(y4.dtype).itemsize

    # Generation-aware VMEM budget (v5e/v6e: 128 MiB physical, v7x: 64 MiB).
    try:
        vmem_cap = int(pltpu.get_tpu_info().vmem_capacity_bytes)
    except Exception:
        vmem_cap = 64 * 1024 * 1024          # conservative (v7x-sized) fallback
    vmem_limit = max(min(vmem_cap * 3 // 4, 112 * 1024 * 1024), 32 * 1024 * 1024)
    block_budget = vmem_limit * 55 // 100    # for the double-buffered x + y input blocks
    per_row = 2 * 128 * (C * x_b + y_b)      # bytes per sublane-row, double-buffered
    budget_rows = max(8, block_budget // per_row)

    NC = max(1, int(num_core_chunks))        # spatial core-chunks (v7x dual-TC friendly)
    S_rows = min(int(max_rows_per_step), int(budget_rows),
                 _round_up(_cdiv(R, NC), 8), (R // 8) * 8)
    S_rows = max(8, (S_rows // 8) * 8)
    if S_rows >= 64:                         # sub-chunk size must divide the block rows
        S_rows = (S_rows // 64) * 64
        in_rows = 64
    else:
        in_rows = S_rows

    total_blocks = _cdiv(R, S_rows)
    n_s = _cdiv(total_blocks, NC)
    last_blk = total_blocks - 1              # clamp DMAs of idle chunks (masked to zero)

    def x_map(nc, b, s):
        return (b, 0, jnp.minimum(nc * n_s + s, last_blk), 0)

    def y_map(nc, b, s):
        return (b, 0, jnp.minimum(nc * n_s + s, last_blk), 0)

    def o_map(nc, b, s):
        return (nc, b, 0, 0, 0)

    grid_spec = pltpu.PrefetchScalarGridSpec(
        num_scalar_prefetch=0,
        grid=(NC, B, n_s),
        in_specs=[
            pl.BlockSpec((1, C, S_rows, 128), x_map),
            pl.BlockSpec((1, 1, S_rows, 128), y_map),
        ],
        out_specs=pl.BlockSpec((1, 1, 3 * C, 8, 128), o_map),
    )

    partials = pl.pallas_call(
        functools.partial(_dice_plus_partial_kernel,
                          C=C, S_rows=S_rows, in_rows=in_rows, n_s=n_s, HW=HW),
        out_shape=jax.ShapeDtypeStruct((NC, B, 3 * C, 8, 128), jnp.float32),
        grid_spec=grid_spec,
        compiler_params=pltpu.CompilerParams(
            dimension_semantics=("parallel", "parallel", "arbitrary"),
            vmem_limit_bytes=int(vmem_limit),
        ),
    )(x4, y4)

    # Finalize in plain JAX: cross-lane reduce of the per-chunk per-lane partials,
    # fp/fn derivation, dice score and mean (batch_dice=False, do_bg=True defaults).
    sums = partials.reshape(NC, B, 3, C, 8 * 128).sum(axis=(0, -1))   # (B, 3, C)
    tp, sx, cnt = sums[:, 0], sums[:, 1], sums[:, 2]
    fp = sx - tp
    fn = cnt - tp
    g = int(gamma) if float(gamma).is_integer() else float(gamma)
    denominator = 2.0 * tp + fn ** g + fp ** g
    dice = (2.0 * tp + smooth) / (denominator + smooth)
    return -jnp.mean(dice)


def _reference_loss(x, y, gamma=2.0, smooth=1.0):
    """Pure-JAX reference mirroring the PyTorch module (defaults, label-map gt)."""
    C = x.shape[1]
    xf = x.astype(jnp.float32)
    y1h = jax.nn.one_hot(y, C, axis=1, dtype=jnp.float32)       # (B, C, *spatial)
    axes = tuple(range(2, x.ndim))
    tp = jnp.sum(xf * y1h, axes)
    fp = jnp.sum(xf * (1.0 - y1h), axes)
    fn = jnp.sum((1.0 - xf) * y1h, axes)
    dice = (2.0 * tp + smooth) / (2.0 * tp + fn ** gamma + fp ** gamma + smooth)
    return -jnp.mean(dice)


if __name__ == "__main__":
    key = jax.random.PRNGKey(0)
    kx1, ky1, kx2, ky2, kx3, ky3 = jax.random.split(key, 6)

    # Check 1: f32 probabilities, 128-multiple spatial size (toy pad-to-1024 path).
    B, C, H, W = 2, 4, 16, 16
    x1 = jax.nn.softmax(jax.random.normal(kx1, (B, C, H, W), jnp.float32), axis=1)
    y1 = jax.random.randint(ky1, (B, H, W), 0, C, dtype=jnp.int32)
    loss1 = jax.block_until_ready(soft_dice_plus_loss(x1, y1))
    ref1 = jax.block_until_ready(_reference_loss(x1, y1))
    assert jnp.allclose(loss1, ref1, atol=1e-5, rtol=1e-5), (float(loss1), float(ref1))

    # Check 2: bf16 probabilities (native-dtype DMA) + non-128-multiple spatial size
    # (exercises the pad-to-128 + in-kernel tail masking path).
    B2, C2, H2, W2 = 2, 4, 10, 14
    x2 = jax.nn.softmax(jax.random.normal(kx2, (B2, C2, H2, W2), jnp.float32),
                        axis=1).astype(jnp.bfloat16)
    y2 = jax.random.randint(ky2, (B2, H2, W2), 0, C2, dtype=jnp.int32)
    loss2 = jax.block_until_ready(soft_dice_plus_loss(x2, y2))
    ref2 = jax.block_until_ready(_reference_loss(x2, y2))
    assert jnp.allclose(loss2, ref2, atol=1e-5, rtol=1e-5), (float(loss2), float(ref2))

    # Check 3: zero-copy (no pad) path with a ragged last spatial block + uint8 labels
    # (narrow label stream), exercising both the fast and the masked in-kernel paths.
    B3, C3, H3, W3 = 2, 4, 48, 48
    x3 = jax.nn.softmax(jax.random.normal(kx3, (B3, C3, H3, W3), jnp.float32), axis=1)
    y3 = jax.random.randint(ky3, (B3, H3, W3), 0, C3, dtype=jnp.int32).astype(jnp.uint8)
    loss3 = jax.block_until_ready(soft_dice_plus_loss(x3, y3))
    ref3 = jax.block_until_ready(_reference_loss(x3, y3))
    assert jnp.allclose(loss3, ref3, atol=1e-5, rtol=1e-5), (float(loss3), float(ref3))

    print("KERNEL_OK")
</pallas_src>

<mosaic_0001>
module attributes {stable_mosaic.version = 11 : i64} {
  func.func @_dice_plus_partial_kernel(%arg0: i32, %arg1: i32, %arg2: i32, %arg3: memref<1x4x8x128xf32, #tpu.memory_space<vmem>>, %arg4: memref<1x1x8x128xi32, #tpu.memory_space<vmem>>, %arg5: memref<1x1x12x8x128xf32, #tpu.memory_space<vmem>>) attributes {dimension_semantics = [#tpu.dimension_semantics<parallel>, #tpu.dimension_semantics<parallel>, #tpu.dimension_semantics<arbitrary>], iteration_bounds = array<i64: 2, 2, 1>, scalar_prefetch = 0 : i64, scratch_operands = 0 : i64, tpu.core_type = #tpu.core_type<tc>, window_params = [{transform_indices = @transform_0, window_bounds = array<i64: 1, 4, 8, 128>}, {transform_indices = @transform_1, window_bounds = array<i64: 1, 1, 8, 128>}, {transform_indices = @transform_2, window_bounds = array<i64: 1, 1, 12, 8, 128>}]} {
    %c0_i32 = arith.constant 0 : i32
    %0 = arith.cmpi eq, %arg2, %c0_i32 : i32
    %1 = arith.extui %0 : i1 to i32
    %c0_i32_0 = arith.constant 0 : i32
    %2 = arith.cmpi ne, %1, %c0_i32_0 : i32
    scf.if %2 {
      %cst = arith.constant 0.000000e+00 : f32
      %13 = vector.broadcast %cst : f32 to vector<1x1x12x8x128xf32>
      %c0 = arith.constant 0 : index
      %c0_4 = arith.constant 0 : index
      %c0_5 = arith.constant 0 : index
      %c0_6 = arith.constant 0 : index
      %c0_7 = arith.constant 0 : index
      %14 = vector.load %arg5[%c0, %c0_4, %c0_5, %c0_6, %c0_7] : memref<1x1x12x8x128xf32, #tpu.memory_space<vmem>>, vector<1x1x12x8x128xf32>
      tpu.vector_store %arg5[%c0, %c0_4, %c0_5, %c0_6, %c0_7], %13 {strides = array<i32>} : memref<1x1x12x8x128xf32, #tpu.memory_space<vmem>>, vector<1x1x12x8x128xf32>,
    } else {
    }
    %c1_i32 = arith.constant 1 : i32
    %3 = arith.muli %arg0, %c1_i32 : i32
    %4 = arith.addi %3, %arg2 : i32
    %c1024_i32 = arith.constant 1024 : i32
    %5 = arith.muli %4, %c1024_i32 : i32
    %c1024_i32_1 = arith.constant 1024 : i32
    %6 = arith.addi %5, %c1024_i32_1 : i32
    %c256_i32 = arith.constant 256 : i32
    %7 = arith.cmpi sle, %6, %c256_i32 : i32
    %8 = arith.extui %7 : i1 to i32
    %c0_i32_2 = arith.constant 0 : i32
    %9 = arith.cmpi ne, %8, %c0_i32_2 : i32
    scf.if %9 {
      %c0_i32_4 = arith.constant 0 : i32
      %c8_i32 = arith.constant 8 : i32
      %13 = arith.muli %c0_i32_4, %c8_i32 : i32
      %14 = tpu.assume_multiple %13, 8 : i32
      %c0 = arith.constant 0 : index
      %c0_5 = arith.constant 0 : index
      %15 = arith.index_cast %14 : i32 to index
      %c0_6 = arith.constant 0 : index
      %16 = vector.load %arg4[%c0, %c0_5, %15, %c0_6] : memref<1x1x8x128xi32, #tpu.memory_space<vmem>>, vector<1x1x8x128xi32>
      %17 = vector.shape_cast %16 : vector<1x1x8x128xi32> to vector<8x128xi32>
      %c0_7 = arith.constant 0 : index
      %c0_8 = arith.constant 0 : index
      %18 = arith.index_cast %14 : i32 to index
      %c0_9 = arith.constant 0 : index
      %19 = vector.load %arg3[%c0_7, %c0_8, %18, %c0_9] : memref<1x4x8x128xf32, #tpu.memory_space<vmem>>, vector<1x1x8x128xf32>
      %20 = vector.shape_cast %19 : vector<1x1x8x128xf32> to vector<8x128xf32>
      %c0_i32_10 = arith.constant 0 : i32
      %21 = vector.broadcast %c0_i32_10 : i32 to vector<8x128xi32>
      %22 = arith.cmpi eq, %17, %21 : vector<8x128xi32>
      %cst = arith.constant 0.000000e+00 : f32
      %23 = vector.broadcast %cst : f32 to vector<8x128xf32>
      %24 = arith.select %22, %20, %23 : vector<8x128xi1>, vector<8x128xf32>
      %cst_11 = arith.constant 1.000000e+00 : f32
      %cst_12 = arith.constant 0.000000e+00 : f32
      %25 = vector.broadcast %cst_11 : f32 to vector<8x128xf32>
      %26 = vector.broadcast %cst_12 : f32 to vector<8x128xf32>
      %27 = arith.select %22, %25, %26 : vector<8x128xi1>, vector<8x128xf32>
      %c0_13 = arith.constant 0 : index
      %c0_14 = arith.constant 0 : index
      %c0_15 = arith.constant 0 : index
      %c0_16 = arith.constant 0 : index
      %c0_17 = arith.constant 0 : index
      %28 = vector.load %arg5[%c0_13, %c0_14, %c0_15, %c0_16, %c0_17] : memref<1x1x12x8x128xf32, #tpu.memory_space<vmem>>, vector<1x1x1x8x128xf32>
      %29 = vector.shape_cast %28 : vector<1x1x1x8x128xf32> to vector<8x128xf32>
      %30 = vector.shape_cast %24 : vector<8x128xf32> to vector<1x8x128xf32>
      %cst_18 = arith.constant dense<0.000000e+00> : vector<8x128xf32>
      %31 = vector.multi_reduction <add>, %30, %cst_18 [0] : vector<1x8x128xf32> to vector<8x128xf32>
      %32 = arith.addf %29, %31 : vector<8x128xf32>
      %c0_19 = arith.constant 0 : index
      %c0_20 = arith.constant 0 : index
      %c0_21 = arith.constant 0 : index
      %c0_22 = arith.constant 0 : index
      %c0_23 = arith.constant 0 : index
      %33 = vector.load %arg5[%c0_19, %c0_20, %c0_21, %c0_22, %c0_23] : memref<1x1x12x8x128xf32, #tpu.memory_space<vmem>>, vector<1x1x1x8x128xf32>
      %34 = vector.shape_cast %33 : vector<1x1x1x8x128xf32> to vector<8x128xf32>
      %35 = vector.shape_cast %32 : vector<8x128xf32> to vector<1x1x1x8x128xf32>
      tpu.vector_store %arg5[%c0_19, %c0_20, %c0_21, %c0_22, %c0_23], %35 {strides = array<i32>} : memref<1x1x12x8x128xf32, #tpu.memory_space<vmem>>, vector<1x1x1x8x128xf32>,
      %c0_24 = arith.constant 0 : index
      %c0_25 = arith.constant 0 : index
      %c4 = arith.constant 4 : index
      %c0_26 = arith.constant 0 : index
      %c0_27 = arith.constant 0 : index
      %36 = vector.load %arg5[%c0_24, %c0_25, %c4, %c0_26, %c0_27] : memref<1x1x12x8x128xf32, #tpu.memory_space<vmem>>, vector<1x1x1x8x128xf32>
      %37 = vector.shape_cast %36 : vector<1x1x1x8x128xf32> to vector<8x128xf32>
      %38 = vector.shape_cast %20 : vector<8x128xf32> to vector<1x8x128xf32>
      %cst_28 = arith.constant dense<0.000000e+00> : vector<8x128xf32>
      %39 = vector.multi_reduction <add>, %38, %cst_28 [0] : vector<1x8x128xf32> to vector<8x128xf32>
      %40 = arith.addf %37, %39 : vector<8x128xf32>
      %c0_29 = arith.constant 0 : index
      %c0_30 = arith.constant 0 : index
      %c4_31 = arith.constant 4 : index
      %c0_32 = arith.constant 0 : index
      %c0_33 = arith.constant 0 : index
      %41 = vector.load %arg5[%c0_29, %c0_30, %c4_31, %c0_32, %c0_33] : memref<1x1x12x8x128xf32, #tpu.memory_space<vmem>>, vector<1x1x1x8x128xf32>
      %42 = vector.shape_cast %41 : vector<1x1x1x8x128xf32> to vector<8x128xf32>
      %43 = vector.shape_cast %40 : vector<8x128xf32> to vector<1x1x1x8x128xf32>
      tpu.vector_store %arg5[%c0_29, %c0_30, %c4_31, %c0_32, %c0_33], %43 {strides = array<i32>} : memref<1x1x12x8x128xf32, #tpu.memory_space<vmem>>, vector<1x1x1x8x128xf32>,
      %c0_34 = arith.constant 0 : index
      %c0_35 = arith.constant 0 : index
      %c8 = arith.constant 8 : index
      %c0_36 = arith.constant 0 : index
      %c0_37 = arith.constant 0 : index
      %44 = vector.load %arg5[%c0_34, %c0_35, %c8, %c0_36, %c0_37] : memref<1x1x12x8x128xf32, #tpu.memory_space<vmem>>, vector<1x1x1x8x128xf32>
      %45 = vector.shape_cast %44 : vector<1x1x1x8x128xf32> to vector<8x128xf32>
      %46 = vector.shape_cast %27 : vector<8x128xf32> to vector<1x8x128xf32>
      %cst_38 = arith.constant dense<0.000000e+00> : vector<8x128xf32>
      %47 = vector.multi_reduction <add>, %46, %cst_38 [0] : vector<1x8x128xf32> to vector<8x128xf32>
      %48 = arith.addf %45, %47 : vector<8x128xf32>
      %c0_39 = arith.constant 0 : index
      %c0_40 = arith.constant 0 : index
      %c8_41 = arith.constant 8 : index
      %c0_42 = arith.constant 0 : index
      %c0_43 = arith.constant 0 : index
      %49 = vector.load %arg5[%c0_39, %c0_40, %c8_41, %c0_42, %c0_43] : memref<1x1x12x8x128xf32, #tpu.memory_space<vmem>>, vector<1x1x1x8x128xf32>
      %50 = vector.shape_cast %49 : vector<1x1x1x8x128xf32> to vector<8x128xf32>
      %51 = vector.shape_cast %48 : vector<8x128xf32> to vector<1x1x1x8x128xf32>
      tpu.vector_store %arg5[%c0_39, %c0_40, %c8_41, %c0_42, %c0_43], %51 {strides = array<i32>} : memref<1x1x12x8x128xf32, #tpu.memory_space<vmem>>, vector<1x1x1x8x128xf32>,
      %c0_44 = arith.constant 0 : index
      %c1 = arith.constant 1 : index
      %52 = arith.index_cast %14 : i32 to index
      %c0_45 = arith.constant 0 : index
      %53 = vector.load %arg3[%c0_44, %c1, %52, %c0_45] : memref<1x4x8x128xf32, #tpu.memory_space<vmem>>, vector<1x1x8x128xf32>
      %54 = vector.shape_cast %53 : vector<1x1x8x128xf32> to vector<8x128xf32>
      %c1_i32_46 = arith.constant 1 : i32
      %55 = vector.broadcast %c1_i32_46 : i32 to vector<8x128xi32>
      %56 = arith.cmpi eq, %17, %55 : vector<8x128xi32>
      %cst_47 = arith.constant 0.000000e+00 : f32
      %57 = vector.broadcast %cst_47 : f32 to vector<8x128xf32>
      %58 = arith.select %56, %54, %57 : vector<8x128xi1>, vector<8x128xf32>
      %cst_48 = arith.constant 1.000000e+00 : f32
      %cst_49 = arith.constant 0.000000e+00 : f32
      %59 = vector.broadcast %cst_48 : f32 to vector<8x128xf32>
      %60 = vector.broadcast %cst_49 : f32 to vector<8x128xf32>
      %61 = arith.select %56, %59, %60 : vector<8x128xi1>, vector<8x128xf32>
      %c0_50 = arith.constant 0 : index
      %c0_51 = arith.constant 0 : index
      %c1_52 = arith.constant 1 : index
      %c0_53 = arith.constant 0 : index
      %c0_54 = arith.constant 0 : index
      %62 = vector.load %arg5[%c0_50, %c0_51, %c1_52, %c0_53, %c0_54] : memref<1x1x12x8x128xf32, #tpu.memory_space<vmem>>, vector<1x1x1x8x128xf32>
      %63 = vector.shape_cast %62 : vector<1x1x1x8x128xf32> to vector<8x128xf32>
      %64 = vector.shape_cast %58 : vector<8x128xf32> to vector<1x8x128xf32>
      %cst_55 = arith.constant dense<0.000000e+00> : vector<8x128xf32>
      %65 = vector.multi_reduction <add>, %64, %cst_55 [0] : vector<1x8x128xf32> to vector<8x128xf32>
      %66 = arith.addf %63, %65 : vector<8x128xf32>
      %c0_56 = arith.constant 0 : index
      %c0_57 = arith.constant 0 : index
      %c1_58 = arith.constant 1 : index
      %c0_59 = arith.constant 0 : index
      %c0_60 = arith.constant 0 : index
      %67 = vector.load %arg5[%c0_56, %c0_57, %c1_58, %c0_59, %c0_60] : memref<1x1x12x8x128xf32, #tpu.memory_space<vmem>>, vector<1x1x1x8x128xf32>
      %68 = vector.shape_cast %67 : vector<1x1x1x8x128xf32> to vector<8x128xf32>
      %69 = vector.shape_cast %66 : vector<8x128xf32> to vector<1x1x1x8x128xf32>
      tpu.vector_store %arg5[%c0_56, %c0_57, %c1_58, %c0_59, %c0_60], %69 {strides = array<i32>} : memref<1x1x12x8x128xf32, #tpu.memory_space<vmem>>, vector<1x1x1x8x128xf32>,
      %c0_61 = arith.constant 0 : index
      %c0_62 = arith.constant 0 : index
      %c5 = arith.constant 5 : index
      %c0_63 = arith.constant 0 : index
      %c0_64 = arith.constant 0 : index
      %70 = vector.load %arg5[%c0_61, %c0_62, %c5, %c0_63, %c0_64] : memref<1x1x12x8x128xf32, #tpu.memory_space<vmem>>, vector<1x1x1x8x128xf32>
      %71 = vector.shape_cast %70 : vector<1x1x1x8x128xf32> to vector<8x128xf32>
      %72 = vector.shape_cast %54 : vector<8x128xf32> to vector<1x8x128xf32>
      %cst_65 = arith.constant dense<0.000000e+00> : vector<8x128xf32>
      %73 = vector.multi_reduction <add>, %72, %cst_65 [0] : vector<1x8x128xf32> to vector<8x128xf32>
      %74 = arith.addf %71, %73 : vector<8x128xf32>
      %c0_66 = arith.constant 0 : index
      %c0_67 = arith.constant 0 : index
      %c5_68 = arith.constant 5 : index
      %c0_69 = arith.constant 0 : index
      %c0_70 = arith.constant 0 : index
      %75 = vector.load %arg5[%c0_66, %c0_67, %c5_68, %c0_69, %c0_70] : memref<1x1x12x8x128xf32, #tpu.memory_space<vmem>>, vector<1x1x1x8x128xf32>
      %76 = vector.shape_cast %75 : vector<1x1x1x8x128xf32> to vector<8x128xf32>
      %77 = vector.shape_cast %74 : vector<8x128xf32> to vector<1x1x1x8x128xf32>
      tpu.vector_store %arg5[%c0_66, %c0_67, %c5_68, %c0_69, %c0_70], %77 {strides = array<i32>} : memref<1x1x12x8x128xf32, #tpu.memory_space<vmem>>, vector<1x1x1x8x128xf32>,
      %c0_71 = arith.constant 0 : index
      %c0_72 = arith.constant 0 : index
      %c9 = arith.constant 9 : index
      %c0_73 = arith.constant 0 : index
      %c0_74 = arith.constant 0 : index
      %78 = vector.load %arg5[%c0_71, %c0_72, %c9, %c0_73, %c0_74] : memref<1x1x12x8x128xf32, #tpu.memory_space<vmem>>, vector<1x1x1x8x128xf32>
      %79 = vector.shape_cast %78 : vector<1x1x1x8x128xf32> to vector<8x128xf32>
      %80 = vector.shape_cast %61 : vector<8x128xf32> to vector<1x8x128xf32>
      %cst_75 = arith.constant dense<0.000000e+00> : vector<8x128xf32>
      %81 = vector.multi_reduction <add>, %80, %cst_75 [0] : vector<1x8x128xf32> to vector<8x128xf32>
      %82 = arith.addf %79, %81 : vector<8x128xf32>
      %c0_76 = arith.constant 0 : index
      %c0_77 = arith.constant 0 : index
      %c9_78 = arith.constant 9 : index
      %c0_79 = arith.constant 0 : index
      %c0_80 = arith.constant 0 : index
      %83 = vector.load %arg5[%c0_76, %c0_77, %c9_78, %c0_79, %c0_80] : memref<1x1x12x8x128xf32, #tpu.memory_space<vmem>>, vector<1x1x1x8x128xf32>
      %84 = vector.shape_cast %83 : vector<1x1x1x8x128xf32> to vector<8x128xf32>
      %85 = vector.shape_cast %82 : vector<8x128xf32> to vector<1x1x1x8x128xf32>
      tpu.vector_store %arg5[%c0_76, %c0_77, %c9_78, %c0_79, %c0_80], %85 {strides = array<i32>} : memref<1x1x12x8x128xf32, #tpu.memory_space<vmem>>, vector<1x1x1x8x128xf32>,
      %c0_81 = arith.constant 0 : index
      %c2 = arith.constant 2 : index
      %86 = arith.index_cast %14 : i32 to index
      %c0_82 = arith.constant 0 : index
      %87 = vector.load %arg3[%c0_81, %c2, %86, %c0_82] : memref<1x4x8x128xf32, #tpu.memory_space<vmem>>, vector<1x1x8x128xf32>
      %88 = vector.shape_cast %87 : vector<1x1x8x128xf32> to vector<8x128xf32>
      %c2_i32 = arith.constant 2 : i32
      %89 = vector.broadcast %c2_i32 : i32 to vector<8x128xi32>
      %90 = arith.cmpi eq, %17, %89 : vector<8x128xi32>
      %cst_83 = arith.constant 0.000000e+00 : f32
      %91 = vector.broadcast %cst_83 : f32 to vector<8x128xf32>
      %92 = arith.select %90, %88, %91 : vector<8x128xi1>, vector<8x128xf32>
      %cst_84 = arith.constant 1.000000e+00 : f32
      %cst_85 = arith.constant 0.000000e+00 : f32
      %93 = vector.broadcast %cst_84 : f32 to vector<8x128xf32>
      %94 = vector.broadcast %cst_85 : f32 to vector<8x128xf32>
      %95 = arith.select %90, %93, %94 : vector<8x128xi1>, vector<8x128xf32>
      %c0_86 = arith.constant 0 : index
      %c0_87 = arith.constant 0 : index
      %c2_88 = arith.constant 2 : index
      %c0_89 = arith.constant 0 : index
      %c0_90 = arith.constant 0 : index
      %96 = vector.load %arg5[%c0_86, %c0_87, %c2_88, %c0_89, %c0_90] : memref<1x1x12x8x128xf32, #tpu.memory_space<vmem>>, vector<1x1x1x8x128xf32>
      %97 = vector.shape_cast %96 : vector<1x1x1x8x128xf32> to vector<8x128xf32>
      %98 = vector.shape_cast %92 : vector<8x128xf32> to vector<1x8x128xf32>
      %cst_91 = arith.constant dense<0.000000e+00> : vector<8x128xf32>
      %99 = vector.multi_reduction <add>, %98, %cst_91 [0] : vector<1x8x128xf32> to vector<8x128xf32>
      %100 = arith.addf %97, %99 : vector<8x128xf32>
      %c0_92 = arith.constant 0 : index
      %c0_93 = arith.constant 0 : index
      %c2_94 = arith.constant 2 : index
      %c0_95 = arith.constant 0 : index
      %c0_96 = arith.constant 0 : index
      %101 = vector.load %arg5[%c0_92, %c0_93, %c2_94, %c0_95, %c0_96] : memref<1x1x12x8x128xf32, #tpu.memory_space<vmem>>, vector<1x1x1x8x128xf32>
      %102 = vector.shape_cast %101 : vector<1x1x1x8x128xf32> to vector<8x128xf32>
      %103 = vector.shape_cast %100 : vector<8x128xf32> to vector<1x1x1x8x128xf32>
      tpu.vector_store %arg5[%c0_92, %c0_93, %c2_94, %c0_95, %c0_96], %103 {strides = array<i32>} : memref<1x1x12x8x128xf32, #tpu.memory_space<vmem>>, vector<1x1x1x8x128xf32>,
      %c0_97 = arith.constant 0 : index
      %c0_98 = arith.constant 0 : index
      %c6 = arith.constant 6 : index
      %c0_99 = arith.constant 0 : index
      %c0_100 = arith.constant 0 : index
      %104 = vector.load %arg5[%c0_97, %c0_98, %c6, %c0_99, %c0_100] : memref<1x1x12x8x128xf32, #tpu.memory_space<vmem>>, vector<1x1x1x8x128xf32>
      %105 = vector.shape_cast %104 : vector<1x1x1x8x128xf32> to vector<8x128xf32>
      %106 = vector.shape_cast %88 : vector<8x128xf32> to vector<1x8x128xf32>
      %cst_101 = arith.constant dense<0.000000e+00> : vector<8x128xf32>
      %107 = vector.multi_reduction <add>, %106, %cst_101 [0] : vector<1x8x128xf32> to vector<8x128xf32>
      %108 = arith.addf %105, %107 : vector<8x128xf32>
      %c0_102 = arith.constant 0 : index
      %c0_103 = arith.constant 0 : index
      %c6_104 = arith.constant 6 : index
      %c0_105 = arith.constant 0 : index
      %c0_106 = arith.constant 0 : index
      %109 = vector.load %arg5[%c0_102, %c0_103, %c6_104, %c0_105, %c0_106] : memref<1x1x12x8x128xf32, #tpu.memory_space<vmem>>, vector<1x1x1x8x128xf32>
      %110 = vector.shape_cast %109 : vector<1x1x1x8x128xf32> to vector<8x128xf32>
      %111 = vector.shape_cast %108 : vector<8x128xf32> to vector<1x1x1x8x128xf32>
      tpu.vector_store %arg5[%c0_102, %c0_103, %c6_104, %c0_105, %c0_106], %111 {strides = array<i32>} : memref<1x1x12x8x128xf32, #tpu.memory_space<vmem>>, vector<1x1x1x8x128xf32>,
      %c0_107 = arith.constant 0 : index
      %c0_108 = arith.constant 0 : index
      %c10 = arith.constant 10 : index
      %c0_109 = arith.constant 0 : index
      %c0_110 = arith.constant 0 : index
      %112 = vector.load %arg5[%c0_107, %c0_108, %c10, %c0_109, %c0_110] : memref<1x1x12x8x128xf32, #tpu.memory_space<vmem>>, vector<1x1x1x8x128xf32>
      %113 = vector.shape_cast %112 : vector<1x1x1x8x128xf32> to vector<8x128xf32>
      %114 = vector.shape_cast %95 : vector<8x128xf32> to vector<1x8x128xf32>
      %cst_111 = arith.constant dense<0.000000e+00> : vector<8x128xf32>
      %115 = vector.multi_reduction <add>, %114, %cst_111 [0] : vector<1x8x128xf32> to vector<8x128xf32>
      %116 = arith.addf %113, %115 : vector<8x128xf32>
      %c0_112 = arith.constant 0 : index
      %c0_113 = arith.constant 0 : index
      %c10_114 = arith.constant 10 : index
      %c0_115 = arith.constant 0 : index
      %c0_116 = arith.constant 0 : index
      %117 = vector.load %arg5[%c0_112, %c0_113, %c10_114, %c0_115, %c0_116] : memref<1x1x12x8x128xf32, #tpu.memory_space<vmem>>, vector<1x1x1x8x128xf32>
      %118 = vector.shape_cast %117 : vector<1x1x1x8x128xf32> to vector<8x128xf32>
      %119 = vector.shape_cast %116 : vector<8x128xf32> to vector<1x1x1x8x128xf32>
      tpu.vector_store %arg5[%c0_112, %c0_113, %c10_114, %c0_115, %c0_116], %119 {strides = array<i32>} : memref<1x1x12x8x128xf32, #tpu.memory_space<vmem>>, vector<1x1x1x8x128xf32>,
      %c0_117 = arith.constant 0 : index
      %c3 = arith.constant 3 : index
      %120 = arith.index_cast %14 : i32 to index
      %c0_118 = arith.constant 0 : index
      %121 = vector.load %arg3[%c0_117, %c3, %120, %c0_118] : memref<1x4x8x128xf32, #tpu.memory_space<vmem>>, vector<1x1x8x128xf32>
      %122 = vector.shape_cast %121 : vector<1x1x8x128xf32> to vector<8x128xf32>
      %c3_i32 = arith.constant 3 : i32
      %123 = vector.broadcast %c3_i32 : i32 to vector<8x128xi32>
      %124 = arith.cmpi eq, %17, %123 : vector<8x128xi32>
      %cst_119 = arith.constant 0.000000e+00 : f32
      %125 = vector.broadcast %cst_119 : f32 to vector<8x128xf32>
      %126 = arith.select %124, %122, %125 : vector<8x128xi1>, vector<8x128xf32>
      %cst_120 = arith.constant 1.000000e+00 : f32
      %cst_121 = arith.constant 0.000000e+00 : f32
      %127 = vector.broadcast %cst_120 : f32 to vector<8x128xf32>
      %128 = vector.broadcast %cst_121 : f32 to vector<8x128xf32>
      %129 = arith.select %124, %127, %128 : vector<8x128xi1>, vector<8x128xf32>
      %c0_122 = arith.constant 0 : index
      %c0_123 = arith.constant 0 : index
      %c3_124 = arith.constant 3 : index
      %c0_125 = arith.constant 0 : index
      %c0_126 = arith.constant 0 : index
      %130 = vector.load %arg5[%c0_122, %c0_123, %c3_124, %c0_125, %c0_126] : memref<1x1x12x8x128xf32, #tpu.memory_space<vmem>>, vector<1x1x1x8x128xf32>
      %131 = vector.shape_cast %130 : vector<1x1x1x8x128xf32> to vector<8x128xf32>
      %132 = vector.shape_cast %126 : vector<8x128xf32> to vector<1x8x128xf32>
      %cst_127 = arith.constant dense<0.000000e+00> : vector<8x128xf32>
      %133 = vector.multi_reduction <add>, %132, %cst_127 [0] : vector<1x8x128xf32> to vector<8x128xf32>
      %134 = arith.addf %131, %133 : vector<8x128xf32>
      %c0_128 = arith.constant 0 : index
      %c0_129 = arith.constant 0 : index
      %c3_130 = arith.constant 3 : index
      %c0_131 = arith.constant 0 : index
      %c0_132 = arith.constant 0 : index
      %135 = vector.load %arg5[%c0_128, %c0_129, %c3_130, %c0_131, %c0_132] : memref<1x1x12x8x128xf32, #tpu.memory_space<vmem>>, vector<1x1x1x8x128xf32>
      %136 = vector.shape_cast %135 : vector<1x1x1x8x128xf32> to vector<8x128xf32>
      %137 = vector.shape_cast %134 : vector<8x128xf32> to vector<1x1x1x8x128xf32>
      tpu.vector_store %arg5[%c0_128, %c0_129, %c3_130, %c0_131, %c0_132], %137 {strides = array<i32>} : memref<1x1x12x8x128xf32, #tpu.memory_space<vmem>>, vector<1x1x1x8x128xf32>,
      %c0_133 = arith.constant 0 : index
      %c0_134 = arith.constant 0 : index
      %c7 = arith.constant 7 : index
      %c0_135 = arith.constant 0 : index
      %c0_136 = arith.constant 0 : index
      %138 = vector.load %arg5[%c0_133, %c0_134, %c7, %c0_135, %c0_136] : memref<1x1x12x8x128xf32, #tpu.memory_space<vmem>>, vector<1x1x1x8x128xf32>
      %139 = vector.shape_cast %138 : vector<1x1x1x8x128xf32> to vector<8x128xf32>
      %140 = vector.shape_cast %122 : vector<8x128xf32> to vector<1x8x128xf32>
      %cst_137 = arith.constant dense<0.000000e+00> : vector<8x128xf32>
      %141 = vector.multi_reduction <add>, %140, %cst_137 [0] : vector<1x8x128xf32> to vector<8x128xf32>
      %142 = arith.addf %139, %141 : vector<8x128xf32>
      %c0_138 = arith.constant 0 : index
      %c0_139 = arith.constant 0 : index
      %c7_140 = arith.constant 7 : index
      %c0_141 = arith.constant 0 : index
      %c0_142 = arith.constant 0 : index
      %143 = vector.load %arg5[%c0_138, %c0_139, %c7_140, %c0_141, %c0_142] : memref<1x1x12x8x128xf32, #tpu.memory_space<vmem>>, vector<1x1x1x8x128xf32>
      %144 = vector.shape_cast %143 : vector<1x1x1x8x128xf32> to vector<8x128xf32>
      %145 = vector.shape_cast %142 : vector<8x128xf32> to vector<1x1x1x8x128xf32>
      tpu.vector_store %arg5[%c0_138, %c0_139, %c7_140, %c0_141, %c0_142], %145 {strides = array<i32>} : memref<1x1x12x8x128xf32, #tpu.memory_space<vmem>>, vector<1x1x1x8x128xf32>,
      %c0_143 = arith.constant 0 : index
      %c0_144 = arith.constant 0 : index
      %c11 = arith.constant 11 : index
      %c0_145 = arith.constant 0 : index
      %c0_146 = arith.constant 0 : index
      %146 = vector.load %arg5[%c0_143, %c0_144, %c11, %c0_145, %c0_146] : memref<1x1x12x8x128xf32, #tpu.memory_space<vmem>>, vector<1x1x1x8x128xf32>
      %147 = vector.shape_cast %146 : vector<1x1x1x8x128xf32> to vector<8x128xf32>
      %148 = vector.shape_cast %129 : vector<8x128xf32> to vector<1x8x128xf32>
      %cst_147 = arith.constant dense<0.000000e+00> : vector<8x128xf32>
      %149 = vector.multi_reduction <add>, %148, %cst_147 [0] : vector<1x8x128xf32> to vector<8x128xf32>
      %150 = arith.addf %147, %149 : vector<8x128xf32>
      %c0_148 = arith.constant 0 : index
      %c0_149 = arith.constant 0 : index
      %c11_150 = arith.constant 11 : index
      %c0_151 = arith.constant 0 : index
      %c0_152 = arith.constant 0 : index
      %151 = vector.load %arg5[%c0_148, %c0_149, %c11_150, %c0_151, %c0_152] : memref<1x1x12x8x128xf32, #tpu.memory_space<vmem>>, vector<1x1x1x8x128xf32>
      %152 = vector.shape_cast %151 : vector<1x1x1x8x128xf32> to vector<8x128xf32>
      %153 = vector.shape_cast %150 : vector<8x128xf32> to vector<1x1x1x8x128xf32>
      tpu.vector_store %arg5[%c0_148, %c0_149, %c11_150, %c0_151, %c0_152], %153 {strides = array<i32>} : memref<1x1x12x8x128xf32, #tpu.memory_space<vmem>>, vector<1x1x1x8x128xf32>,
      %c1_i32_153 = arith.constant 1 : i32
    } else {
    }
    %true = arith.constant true
    %10 = arith.xori %7, %true : i1
    %11 = arith.extui %10 : i1 to i32
    %c0_i32_3 = arith.constant 0 : i32
    %12 = arith.cmpi ne, %11, %c0_i32_3 : i32
    scf.if %12 {
      %c0_i32_4 = arith.constant 0 : i32
      %c8_i32 = arith.constant 8 : i32
      %13 = arith.muli %c0_i32_4, %c8_i32 : i32
      %14 = tpu.assume_multiple %13, 8 : i32
      %c0 = arith.constant 0 : index
      %c0_5 = arith.constant 0 : index
      %15 = arith.index_cast %14 : i32 to index
      %c0_6 = arith.constant 0 : index
      %16 = vector.load %arg4[%c0, %c0_5, %15, %c0_6] : memref<1x1x8x128xi32, #tpu.memory_space<vmem>>, vector<1x1x8x128xi32>
      %17 = vector.shape_cast %16 : vector<1x1x8x128xi32> to vector<8x128xi32>
      %18 = tpu.iota {dimensions = array<i32: 0>} : vector<8x128xi32>
      %19 = tpu.iota {dimensions = array<i32: 1>} : vector<8x128xi32>
      %20 = vector.broadcast %14 : i32 to vector<8x128xi32>
      %21 = arith.addi %20, %18 : vector<8x128xi32>
      %c128_i32 = arith.constant 128 : i32
      %22 = vector.broadcast %c128_i32 : i32 to vector<8x128xi32>
      %23 = arith.muli %21, %22 : vector<8x128xi32>
      %24 = vector.broadcast %5 : i32 to vector<8x128xi32>
      %25 = arith.addi %24, %23 : vector<8x128xi32>
      %26 = arith.addi %25, %19 : vector<8x128xi32>
      %c256_i32_7 = arith.constant 256 : i32
      %27 = vector.broadcast %c256_i32_7 : i32 to vector<8x128xi32>
      %28 = arith.cmpi slt, %26, %27 : vector<8x128xi32>
      %c0_8 = arith.constant 0 : index
      %c0_9 = arith.constant 0 : index
      %29 = arith.index_cast %14 : i32 to index
      %c0_10 = arith.constant 0 : index
      %30 = vector.load %arg3[%c0_8, %c0_9, %29, %c0_10] : memref<1x4x8x128xf32, #tpu.memory_space<vmem>>, vector<1x1x8x128xf32>
      %31 = vector.shape_cast %30 : vector<1x1x8x128xf32> to vector<8x128xf32>
      %c0_i32_11 = arith.constant 0 : i32
      %32 = vector.broadcast %c0_i32_11 : i32 to vector<8x128xi32>
      %33 = arith.cmpi eq, %17, %32 : vector<8x128xi32>
      %34 = arith.andi %33, %28 : vector<8x128xi1>
      %cst = arith.constant 0.000000e+00 : f32
      %35 = vector.broadcast %cst : f32 to vector<8x128xf32>
      %36 = arith.select %28, %31, %35 : vector<8x128xi1>, vector<8x128xf32>
      %cst_12 = arith.constant 0.000000e+00 : f32
      %37 = vector.broadcast %cst_12 : f32 to vector<8x128xf32>
      %38 = arith.select %34, %31, %37 : vector<8x128xi1>, vector<8x128xf32>
      %cst_13 = arith.constant 1.000000e+00 : f32
      %cst_14 = arith.constant 0.000000e+00 : f32
      %39 = vector.broadcast %cst_13 : f32 to vector<8x128xf32>
      %40 = vector.broadcast %cst_14 : f32 to vector<8x128xf32>
      %41 = arith.select %34, %39, %40 : vector<8x128xi1>, vector<8x128xf32>
      %c0_15 = arith.constant 0 : index
      %c0_16 = arith.constant 0 : index
      %c0_17 = arith.constant 0 : index
      %c0_18 = arith.constant 0 : index
      %c0_19 = arith.constant 0 : index
      %42 = vector.load %arg5[%c0_15, %c0_16, %c0_17, %c0_18, %c0_19] : memref<1x1x12x8x128xf32, #tpu.memory_space<vmem>>, vector<1x1x1x8x128xf32>
      %43 = vector.shape_cast %42 : vector<1x1x1x8x128xf32> to vector<8x128xf32>
      %44 = vector.shape_cast %38 : vector<8x128xf32> to vector<1x8x128xf32>
      %cst_20 = arith.constant dense<0.000000e+00> : vector<8x128xf32>
      %45 = vector.multi_reduction <add>, %44, %cst_20 [0] : vector<1x8x128xf32> to vector<8x128xf32>
      %46 = arith.addf %43, %45 : vector<8x128xf32>
      %c0_21 = arith.constant 0 : index
      %c0_22 = arith.constant 0 : index
      %c0_23 = arith.constant 0 : index
      %c0_24 = arith.constant 0 : index
      %c0_25 = arith.constant 0 : index
      %47 = vector.load %arg5[%c0_21, %c0_22, %c0_23, %c0_24, %c0_25] : memref<1x1x12x8x128xf32, #tpu.memory_space<vmem>>, vector<1x1x1x8x128xf32>
      %48 = vector.shape_cast %47 : vector<1x1x1x8x128xf32> to vector<8x128xf32>
      %49 = vector.shape_cast %46 : vector<8x128xf32> to vector<1x1x1x8x128xf32>
      tpu.vector_store %arg5[%c0_21, %c0_22, %c0_23, %c0_24, %c0_25], %49 {strides = array<i32>} : memref<1x1x12x8x128xf32, #tpu.memory_space<vmem>>, vector<1x1x1x8x128xf32>,
      %c0_26 = arith.constant 0 : index
      %c0_27 = arith.constant 0 : index
      %c4 = arith.constant 4 : index
      %c0_28 = arith.constant 0 : index
      %c0_29 = arith.constant 0 : index
      %50 = vector.load %arg5[%c0_26, %c0_27, %c4, %c0_28, %c0_29] : memref<1x1x12x8x128xf32, #tpu.memory_space<vmem>>, vector<1x1x1x8x128xf32>
      %51 = vector.shape_cast %50 : vector<1x1x1x8x128xf32> to vector<8x128xf32>
      %52 = vector.shape_cast %36 : vector<8x128xf32> to vector<1x8x128xf32>
      %cst_30 = arith.constant dense<0.000000e+00> : vector<8x128xf32>
      %53 = vector.multi_reduction <add>, %52, %cst_30 [0] : vector<1x8x128xf32> to vector<8x128xf32>
      %54 = arith.addf %51, %53 : vector<8x128xf32>
      %c0_31 = arith.constant 0 : index
      %c0_32 = arith.constant 0 : index
      %c4_33 = arith.constant 4 : index
      %c0_34 = arith.constant 0 : index
      %c0_35 = arith.constant 0 : index
      %55 = vector.load %arg5[%c0_31, %c0_32, %c4_33, %c0_34, %c0_35] : memref<1x1x12x8x128xf32, #tpu.memory_space<vmem>>, vector<1x1x1x8x128xf32>
      %56 = vector.shape_cast %55 : vector<1x1x1x8x128xf32> to vector<8x128xf32>
      %57 = vector.shape_cast %54 : vector<8x128xf32> to vector<1x1x1x8x128xf32>
      tpu.vector_store %arg5[%c0_31, %c0_32, %c4_33, %c0_34, %c0_35], %57 {strides = array<i32>} : memref<1x1x12x8x128xf32, #tpu.memory_space<vmem>>, vector<1x1x1x8x128xf32>,
      %c0_36 = arith.constant 0 : index
      %c0_37 = arith.constant 0 : index
      %c8 = arith.constant 8 : index
      %c0_38 = arith.constant 0 : index
      %c0_39 = arith.constant 0 : index
      %58 = vector.load %arg5[%c0_36, %c0_37, %c8, %c0_38, %c0_39] : memref<1x1x12x8x128xf32, #tpu.memory_space<vmem>>, vector<1x1x1x8x128xf32>
      %59 = vector.shape_cast %58 : vector<1x1x1x8x128xf32> to vector<8x128xf32>
      %60 = vector.shape_cast %41 : vector<8x128xf32> to vector<1x8x128xf32>
      %cst_40 = arith.constant dense<0.000000e+00> : vector<8x128xf32>
      %61 = vector.multi_reduction <add>, %60, %cst_40 [0] : vector<1x8x128xf32> to vector<8x128xf32>
      %62 = arith.addf %59, %61 : vector<8x128xf32>
      %c0_41 = arith.constant 0 : index
      %c0_42 = arith.constant 0 : index
      %c8_43 = arith.constant 8 : index
      %c0_44 = arith.constant 0 : index
      %c0_45 = arith.constant 0 : index
      %63 = vector.load %arg5[%c0_41, %c0_42, %c8_43, %c0_44, %c0_45] : memref<1x1x12x8x128xf32, #tpu.memory_space<vmem>>, vector<1x1x1x8x128xf32>
      %64 = vector.shape_cast %63 : vector<1x1x1x8x128xf32> to vector<8x128xf32>
      %65 = vector.shape_cast %62 : vector<8x128xf32> to vector<1x1x1x8x128xf32>
      tpu.vector_store %arg5[%c0_41, %c0_42, %c8_43, %c0_44, %c0_45], %65 {strides = array<i32>} : memref<1x1x12x8x128xf32, #tpu.memory_space<vmem>>, vector<1x1x1x8x128xf32>,
      %c0_46 = arith.constant 0 : index
      %c1 = arith.constant 1 : index
      %66 = arith.index_cast %14 : i32 to index
      %c0_47 = arith.constant 0 : index
      %67 = vector.load %arg3[%c0_46, %c1, %66, %c0_47] : memref<1x4x8x128xf32, #tpu.memory_space<vmem>>, vector<1x1x8x128xf32>
      %68 = vector.shape_cast %67 : vector<1x1x8x128xf32> to vector<8x128xf32>
      %c1_i32_48 = arith.constant 1 : i32
      %69 = vector.broadcast %c1_i32_48 : i32 to vector<8x128xi32>
      %70 = arith.cmpi eq, %17, %69 : vector<8x128xi32>
      %71 = arith.andi %70, %28 : vector<8x128xi1>
      %cst_49 = arith.constant 0.000000e+00 : f32
      %72 = vector.broadcast %cst_49 : f32 to vector<8x128xf32>
      %73 = arith.select %28, %68, %72 : vector<8x128xi1>, vector<8x128xf32>
      %cst_50 = arith.constant 0.000000e+00 : f32
      %74 = vector.broadcast %cst_50 : f32 to vector<8x128xf32>
      %75 = arith.select %71, %68, %74 : vector<8x128xi1>, vector<8x128xf32>
      %cst_51 = arith.constant 1.000000e+00 : f32
      %cst_52 = arith.constant 0.000000e+00 : f32
      %76 = vector.broadcast %cst_51 : f32 to vector<8x128xf32>
      %77 = vector.broadcast %cst_52 : f32 to vector<8x128xf32>
      %78 = arith.select %71, %76, %77 : vector<8x128xi1>, vector<8x128xf32>
      %c0_53 = arith.constant 0 : index
      %c0_54 = arith.constant 0 : index
      %c1_55 = arith.constant 1 : index
      %c0_56 = arith.constant 0 : index
      %c0_57 = arith.constant 0 : index
      %79 = vector.load %arg5[%c0_53, %c0_54, %c1_55, %c0_56, %c0_57] : memref<1x1x12x8x128xf32, #tpu.memory_space<vmem>>, vector<1x1x1x8x128xf32>
      %80 = vector.shape_cast %79 : vector<1x1x1x8x128xf32> to vector<8x128xf32>
      %81 = vector.shape_cast %75 : vector<8x128xf32> to vector<1x8x128xf32>
      %cst_58 = arith.constant dense<0.000000e+00> : vector<8x128xf32>
      %82 = vector.multi_reduction <add>, %81, %cst_58 [0] : vector<1x8x128xf32> to vector<8x128xf32>
      %83 = arith.addf %80, %82 : vector<8x128xf32>
      %c0_59 = arith.constant 0 : index
      %c0_60 = arith.constant 0 : index
      %c1_61 = arith.constant 1 : index
      %c0_62 = arith.constant 0 : index
      %c0_63 = arith.constant 0 : index
      %84 = vector.load %arg5[%c0_59, %c0_60, %c1_61, %c0_62, %c0_63] : memref<1x1x12x8x128xf32, #tpu.memory_space<vmem>>, vector<1x1x1x8x128xf32>
      %85 = vector.shape_cast %84 : vector<1x1x1x8x128xf32> to vector<8x128xf32>
      %86 = vector.shape_cast %83 : vector<8x128xf32> to vector<1x1x1x8x128xf32>
      tpu.vector_store %arg5[%c0_59, %c0_60, %c1_61, %c0_62, %c0_63], %86 {strides = array<i32>} : memref<1x1x12x8x128xf32, #tpu.memory_space<vmem>>, vector<1x1x1x8x128xf32>,
      %c0_64 = arith.constant 0 : index
      %c0_65 = arith.constant 0 : index
      %c5 = arith.constant 5 : index
      %c0_66 = arith.constant 0 : index
      %c0_67 = arith.constant 0 : index
      %87 = vector.load %arg5[%c0_64, %c0_65, %c5, %c0_66, %c0_67] : memref<1x1x12x8x128xf32, #tpu.memory_space<vmem>>, vector<1x1x1x8x128xf32>
      %88 = vector.shape_cast %87 : vector<1x1x1x8x128xf32> to vector<8x128xf32>
      %89 = vector.shape_cast %73 : vector<8x128xf32> to vector<1x8x128xf32>
      %cst_68 = arith.constant dense<0.000000e+00> : vector<8x128xf32>
      %90 = vector.multi_reduction <add>, %89, %cst_68 [0] : vector<1x8x128xf32> to vector<8x128xf32>
      %91 = arith.addf %88, %90 : vector<8x128xf32>
      %c0_69 = arith.constant 0 : index
      %c0_70 = arith.constant 0 : index
      %c5_71 = arith.constant 5 : index
      %c0_72 = arith.constant 0 : index
      %c0_73 = arith.constant 0 : index
      %92 = vector.load %arg5[%c0_69, %c0_70, %c5_71, %c0_72, %c0_73] : memref<1x1x12x8x128xf32, #tpu.memory_space<vmem>>, vector<1x1x1x8x128xf32>
      %93 = vector.shape_cast %92 : vector<1x1x1x8x128xf32> to vector<8x128xf32>
      %94 = vector.shape_cast %91 : vector<8x128xf32> to vector<1x1x1x8x128xf32>
      tpu.vector_store %arg5[%c0_69, %c0_70, %c5_71, %c0_72, %c0_73], %94 {strides = array<i32>} : memref<1x1x12x8x128xf32, #tpu.memory_space<vmem>>, vector<1x1x1x8x128xf32>,
      %c0_74 = arith.constant 0 : index
      %c0_75 = arith.constant 0 : index
      %c9 = arith.constant 9 : index
      %c0_76 = arith.constant 0 : index
      %c0_77 = arith.constant 0 : index
      %95 = vector.load %arg5[%c0_74, %c0_75, %c9, %c0_76, %c0_77] : memref<1x1x12x8x128xf32, #tpu.memory_space<vmem>>, vector<1x1x1x8x128xf32>
      %96 = vector.shape_cast %95 : vector<1x1x1x8x128xf32> to vector<8x128xf32>
      %97 = vector.shape_cast %78 : vector<8x128xf32> to vector<1x8x128xf32>
      %cst_78 = arith.constant dense<0.000000e+00> : vector<8x128xf32>
      %98 = vector.multi_reduction <add>, %97, %cst_78 [0] : vector<1x8x128xf32> to vector<8x128xf32>
      %99 = arith.addf %96, %98 : vector<8x128xf32>
      %c0_79 = arith.constant 0 : index
      %c0_80 = arith.constant 0 : index
      %c9_81 = arith.constant 9 : index
      %c0_82 = arith.constant 0 : index
      %c0_83 = arith.constant 0 : index
      %100 = vector.load %arg5[%c0_79, %c0_80, %c9_81, %c0_82, %c0_83] : memref<1x1x12x8x128xf32, #tpu.memory_space<vmem>>, vector<1x1x1x8x128xf32>
      %101 = vector.shape_cast %100 : vector<1x1x1x8x128xf32> to vector<8x128xf32>
      %102 = vector.shape_cast %99 : vector<8x128xf32> to vector<1x1x1x8x128xf32>
      tpu.vector_store %arg5[%c0_79, %c0_80, %c9_81, %c0_82, %c0_83], %102 {strides = array<i32>} : memref<1x1x12x8x128xf32, #tpu.memory_space<vmem>>, vector<1x1x1x8x128xf32>,
      %c0_84 = arith.constant 0 : index
      %c2 = arith.constant 2 : index
      %103 = arith.index_cast %14 : i32 to index
      %c0_85 = arith.constant 0 : index
      %104 = vector.load %arg3[%c0_84, %c2, %103, %c0_85] : memref<1x4x8x128xf32, #tpu.memory_space<vmem>>, vector<1x1x8x128xf32>
      %105 = vector.shape_cast %104 : vector<1x1x8x128xf32> to vector<8x128xf32>
      %c2_i32 = arith.constant 2 : i32
      %106 = vector.broadcast %c2_i32 : i32 to vector<8x128xi32>
      %107 = arith.cmpi eq, %17, %106 : vector<8x128xi32>
      %108 = arith.andi %107, %28 : vector<8x128xi1>
      %cst_86 = arith.constant 0.000000e+00 : f32
      %109 = vector.broadcast %cst_86 : f32 to vector<8x128xf32>
      %110 = arith.select %28, %105, %109 : vector<8x128xi1>, vector<8x128xf32>
      %cst_87 = arith.constant 0.000000e+00 : f32
      %111 = vector.broadcast %cst_87 : f32 to vector<8x128xf32>
      %112 = arith.select %108, %105, %111 : vector<8x128xi1>, vector<8x128xf32>
      %cst_88 = arith.constant 1.000000e+00 : f32
      %cst_89 = arith.constant 0.000000e+00 : f32
      %113 = vector.broadcast %cst_88 : f32 to vector<8x128xf32>
      %114 = vector.broadcast %cst_89 : f32 to vector<8x128xf32>
      %115 = arith.select %108, %113, %114 : vector<8x128xi1>, vector<8x128xf32>
      %c0_90 = arith.constant 0 : index
      %c0_91 = arith.constant 0 : index
      %c2_92 = arith.constant 2 : index
      %c0_93 = arith.constant 0 : index
      %c0_94 = arith.constant 0 : index
      %116 = vector.load %arg5[%c0_90, %c0_91, %c2_92, %c0_93, %c0_94] : memref<1x1x12x8x128xf32, #tpu.memory_space<vmem>>, vector<1x1x1x8x128xf32>
      %117 = vector.shape_cast %116 : vector<1x1x1x8x128xf32> to vector<8x128xf32>
      %118 = vector.shape_cast %112 : vector<8x128xf32> to vector<1x8x128xf32>
      %cst_95 = arith.constant dense<0.000000e+00> : vector<8x128xf32>
      %119 = vector.multi_reduction <add>, %118, %cst_95 [0] : vector<1x8x128xf32> to vector<8x128xf32>
      %120 = arith.addf %117, %119 : vector<8x128xf32>
      %c0_96 = arith.constant 0 : index
      %c0_97 = arith.constant 0 : index
      %c2_98 = arith.constant 2 : index
      %c0_99 = arith.constant 0 : index
      %c0_100 = arith.constant 0 : index
      %121 = vector.load %arg5[%c0_96, %c0_97, %c2_98, %c0_99, %c0_100] : memref<1x1x12x8x128xf32, #tpu.memory_space<vmem>>, vector<1x1x1x8x128xf32>
      %122 = vector.shape_cast %121 : vector<1x1x1x8x128xf32> to vector<8x128xf32>
      %123 = vector.shape_cast %120 : vector<8x128xf32> to vector<1x1x1x8x128xf32>
      tpu.vector_store %arg5[%c0_96, %c0_97, %c2_98, %c0_99, %c0_100], %123 {strides = array<i32>} : memref<1x1x12x8x128xf32, #tpu.memory_space<vmem>>, vector<1x1x1x8x128xf32>,
      %c0_101 = arith.constant 0 : index
      %c0_102 = arith.constant 0 : index
      %c6 = arith.constant 6 : index
      %c0_103 = arith.constant 0 : index
      %c0_104 = arith.constant 0 : index
      %124 = vector.load %arg5[%c0_101, %c0_102, %c6, %c0_103, %c0_104] : memref<1x1x12x8x128xf32, #tpu.memory_space<vmem>>, vector<1x1x1x8x128xf32>
      %125 = vector.shape_cast %124 : vector<1x1x1x8x128xf32> to vector<8x128xf32>
      %126 = vector.shape_cast %110 : vector<8x128xf32> to vector<1x8x128xf32>
      %cst_105 = arith.constant dense<0.000000e+00> : vector<8x128xf32>
      %127 = vector.multi_reduction <add>, %126, %cst_105 [0] : vector<1x8x128xf32> to vector<8x128xf32>
      %128 = arith.addf %125, %127 : vector<8x128xf32>
      %c0_106 = arith.constant 0 : index
      %c0_107 = arith.constant 0 : index
      %c6_108 = arith.constant 6 : index
      %c0_109 = arith.constant 0 : index
      %c0_110 = arith.constant 0 : index
      %129 = vector.load %arg5[%c0_106, %c0_107, %c6_108, %c0_109, %c0_110] : memref<1x1x12x8x128xf32, #tpu.memory_space<vmem>>, vector<1x1x1x8x128xf32>
      %130 = vector.shape_cast %129 : vector<1x1x1x8x128xf32> to vector<8x128xf32>
      %131 = vector.shape_cast %128 : vector<8x128xf32> to vector<1x1x1x8x128xf32>
      tpu.vector_store %arg5[%c0_106, %c0_107, %c6_108, %c0_109, %c0_110], %131 {strides = array<i32>} : memref<1x1x12x8x128xf32, #tpu.memory_space<vmem>>, vector<1x1x1x8x128xf32>,
      %c0_111 = arith.constant 0 : index
      %c0_112 = arith.constant 0 : index
      %c10 = arith.constant 10 : index
      %c0_113 = arith.constant 0 : index
      %c0_114 = arith.constant 0 : index
      %132 = vector.load %arg5[%c0_111, %c0_112, %c10, %c0_113, %c0_114] : memref<1x1x12x8x128xf32, #tpu.memory_space<vmem>>, vector<1x1x1x8x128xf32>
      %133 = vector.shape_cast %132 : vector<1x1x1x8x128xf32> to vector<8x128xf32>
      %134 = vector.shape_cast %115 : vector<8x128xf32> to vector<1x8x128xf32>
      %cst_115 = arith.constant dense<0.000000e+00> : vector<8x128xf32>
      %135 = vector.multi_reduction <add>, %134, %cst_115 [0] : vector<1x8x128xf32> to vector<8x128xf32>
      %136 = arith.addf %133, %135 : vector<8x128xf32>
      %c0_116 = arith.constant 0 : index
      %c0_117 = arith.constant 0 : index
      %c10_118 = arith.constant 10 : index
      %c0_119 = arith.constant 0 : index
      %c0_120 = arith.constant 0 : index
      %137 = vector.load %arg5[%c0_116, %c0_117, %c10_118, %c0_119, %c0_120] : memref<1x1x12x8x128xf32, #tpu.memory_space<vmem>>, vector<1x1x1x8x128xf32>
      %138 = vector.shape_cast %137 : vector<1x1x1x8x128xf32> to vector<8x128xf32>
      %139 = vector.shape_cast %136 : vector<8x128xf32> to vector<1x1x1x8x128xf32>
      tpu.vector_store %arg5[%c0_116, %c0_117, %c10_118, %c0_119, %c0_120], %139 {strides = array<i32>} : memref<1x1x12x8x128xf32, #tpu.memory_space<vmem>>, vector<1x1x1x8x128xf32>,
      %c0_121 = arith.constant 0 : index
      %c3 = arith.constant 3 : index
      %140 = arith.index_cast %14 : i32 to index
      %c0_122 = arith.constant 0 : index
      %141 = vector.load %arg3[%c0_121, %c3, %140, %c0_122] : memref<1x4x8x128xf32, #tpu.memory_space<vmem>>, vector<1x1x8x128xf32>
      %142 = vector.shape_cast %141 : vector<1x1x8x128xf32> to vector<8x128xf32>
      %c3_i32 = arith.constant 3 : i32
      %143 = vector.broadcast %c3_i32 : i32 to vector<8x128xi32>
      %144 = arith.cmpi eq, %17, %143 : vector<8x128xi32>
      %145 = arith.andi %144, %28 : vector<8x128xi1>
      %cst_123 = arith.constant 0.000000e+00 : f32
      %146 = vector.broadcast %cst_123 : f32 to vector<8x128xf32>
      %147 = arith.select %28, %142, %146 : vector<8x128xi1>, vector<8x128xf32>
      %cst_124 = arith.constant 0.000000e+00 : f32
      %148 = vector.broadcast %cst_124 : f32 to vector<8x128xf32>
      %149 = arith.select %145, %142, %148 : vector<8x128xi1>, vector<8x128xf32>
      %cst_125 = arith.constant 1.000000e+00 : f32
      %cst_126 = arith.constant 0.000000e+00 : f32
      %150 = vector.broadcast %cst_125 : f32 to vector<8x128xf32>
      %151 = vector.broadcast %cst_126 : f32 to vector<8x128xf32>
      %152 = arith.select %145, %150, %151 : vector<8x128xi1>, vector<8x128xf32>
      %c0_127 = arith.constant 0 : index
      %c0_128 = arith.constant 0 : index
      %c3_129 = arith.constant 3 : index
      %c0_130 = arith.constant 0 : index
      %c0_131 = arith.constant 0 : index
      %153 = vector.load %arg5[%c0_127, %c0_128, %c3_129, %c0_130, %c0_131] : memref<1x1x12x8x128xf32, #tpu.memory_space<vmem>>, vector<1x1x1x8x128xf32>
      %154 = vector.shape_cast %153 : vector<1x1x1x8x128xf32> to vector<8x128xf32>
      %155 = vector.shape_cast %149 : vector<8x128xf32> to vector<1x8x128xf32>
      %cst_132 = arith.constant dense<0.000000e+00> : vector<8x128xf32>
      %156 = vector.multi_reduction <add>, %155, %cst_132 [0] : vector<1x8x128xf32> to vector<8x128xf32>
      %157 = arith.addf %154, %156 : vector<8x128xf32>
      %c0_133 = arith.constant 0 : index
      %c0_134 = arith.constant 0 : index
      %c3_135 = arith.constant 3 : index
      %c0_136 = arith.constant 0 : index
      %c0_137 = arith.constant 0 : index
      %158 = vector.load %arg5[%c0_133, %c0_134, %c3_135, %c0_136, %c0_137] : memref<1x1x12x8x128xf32, #tpu.memory_space<vmem>>, vector<1x1x1x8x128xf32>
      %159 = vector.shape_cast %158 : vector<1x1x1x8x128xf32> to vector<8x128xf32>
      %160 = vector.shape_cast %157 : vector<8x128xf32> to vector<1x1x1x8x128xf32>
      tpu.vector_store %arg5[%c0_133, %c0_134, %c3_135, %c0_136, %c0_137], %160 {strides = array<i32>} : memref<1x1x12x8x128xf32, #tpu.memory_space<vmem>>, vector<1x1x1x8x128xf32>,
      %c0_138 = arith.constant 0 : index
      %c0_139 = arith.constant 0 : index
      %c7 = arith.constant 7 : index
      %c0_140 = arith.constant 0 : index
      %c0_141 = arith.constant 0 : index
      %161 = vector.load %arg5[%c0_138, %c0_139, %c7, %c0_140, %c0_141] : memref<1x1x12x8x128xf32, #tpu.memory_space<vmem>>, vector<1x1x1x8x128xf32>
      %162 = vector.shape_cast %161 : vector<1x1x1x8x128xf32> to vector<8x128xf32>
      %163 = vector.shape_cast %147 : vector<8x128xf32> to vector<1x8x128xf32>
      %cst_142 = arith.constant dense<0.000000e+00> : vector<8x128xf32>
      %164 = vector.multi_reduction <add>, %163, %cst_142 [0] : vector<1x8x128xf32> to vector<8x128xf32>
      %165 = arith.addf %162, %164 : vector<8x128xf32>
      %c0_143 = arith.constant 0 : index
      %c0_144 = arith.constant 0 : index
      %c7_145 = arith.constant 7 : index
      %c0_146 = arith.constant 0 : index
      %c0_147 = arith.constant 0 : index
      %166 = vector.load %arg5[%c0_143, %c0_144, %c7_145, %c0_146, %c0_147] : memref<1x1x12x8x128xf32, #tpu.memory_space<vmem>>, vector<1x1x1x8x128xf32>
      %167 = vector.shape_cast %166 : vector<1x1x1x8x128xf32> to vector<8x128xf32>
      %168 = vector.shape_cast %165 : vector<8x128xf32> to vector<1x1x1x8x128xf32>
      tpu.vector_store %arg5[%c0_143, %c0_144, %c7_145, %c0_146, %c0_147], %168 {strides = array<i32>} : memref<1x1x12x8x128xf32, #tpu.memory_space<vmem>>, vector<1x1x1x8x128xf32>,
      %c0_148 = arith.constant 0 : index
      %c0_149 = arith.constant 0 : index
      %c11 = arith.constant 11 : index
      %c0_150 = arith.constant 0 : index
      %c0_151 = arith.constant 0 : index
      %169 = vector.load %arg5[%c0_148, %c0_149, %c11, %c0_150, %c0_151] : memref<1x1x12x8x128xf32, #tpu.memory_space<vmem>>, vector<1x1x1x8x128xf32>
      %170 = vector.shape_cast %169 : vector<1x1x1x8x128xf32> to vector<8x128xf32>
      %171 = vector.shape_cast %152 : vector<8x128xf32> to vector<1x8x128xf32>
      %cst_152 = arith.constant dense<0.000000e+00> : vector<8x128xf32>
      %172 = vector.multi_reduction <add>, %171, %cst_152 [0] : vector<1x8x128xf32> to vector<8x128xf32>
      %173 = arith.addf %170, %172 : vector<8x128xf32>
      %c0_153 = arith.constant 0 : index
      %c0_154 = arith.constant 0 : index
      %c11_155 = arith.constant 11 : index
      %c0_156 = arith.constant 0 : index
      %c0_157 = arith.constant 0 : index
      %174 = vector.load %arg5[%c0_153, %c0_154, %c11_155, %c0_156, %c0_157] : memref<1x1x12x8x128xf32, #tpu.memory_space<vmem>>, vector<1x1x1x8x128xf32>
      %175 = vector.shape_cast %174 : vector<1x1x1x8x128xf32> to vector<8x128xf32>
      %176 = vector.shape_cast %173 : vector<8x128xf32> to vector<1x1x1x8x128xf32>
      tpu.vector_store %arg5[%c0_153, %c0_154, %c11_155, %c0_156, %c0_157], %176 {strides = array<i32>} : memref<1x1x12x8x128xf32, #tpu.memory_space<vmem>>, vector<1x1x1x8x128xf32>,
      %c1_i32_158 = arith.constant 1 : i32
    } else {
    }
    return
  }
  func.func @transform_0(%arg0: i32, %arg1: i32, %arg2: i32) -> (i32, i32, i32, i32) {
    %c1_i32 = arith.constant 1 : i32
    %0 = arith.muli %arg0, %c1_i32 : i32
    %1 = arith.addi %0, %arg2 : i32
    %c0_i32 = arith.constant 0 : i32
    %2 = arith.minsi %1, %c0_i32 : i32
    %c0_i32_0 = arith.constant 0 : i32
    %c0_i32_1 = arith.constant 0 : i32
    %c0_i32_2 = arith.constant 0 : i32
    return %arg1, %c0_i32_0, %2, %c0_i32_1 : i32, i32, i32, i32
  }
  func.func @transform_1(%arg0: i32, %arg1: i32, %arg2: i32) -> (i32, i32, i32, i32) {
    %c1_i32 = arith.constant 1 : i32
    %0 = arith.muli %arg0, %c1_i32 : i32
    %1 = arith.addi %0, %arg2 : i32
    %c0_i32 = arith.constant 0 : i32
    %2 = arith.minsi %1, %c0_i32 : i32
    %c0_i32_0 = arith.constant 0 : i32
    %c0_i32_1 = arith.constant 0 : i32
    %c0_i32_2 = arith.constant 0 : i32
    return %arg1, %c0_i32_0, %2, %c0_i32_1 : i32, i32, i32, i32
  }
  func.func @transform_2(%arg0: i32, %arg1: i32, %arg2: i32) -> (i32, i32, i32, i32, i32) {
    %c0_i32 = arith.constant 0 : i32
    %c0_i32_0 = arith.constant 0 : i32
    %c0_i32_1 = arith.constant 0 : i32
    %c0_i32_2 = arith.constant 0 : i32
    return %arg0, %arg1, %c0_i32, %c0_i32_0, %c0_i32_1 : i32, i32, i32, i32, i32
  }
}

</mosaic_0001>

<llo_original>
// kernel: tpu_custom_call.1
$region0: #{tpu_custom_call.1}
  #allocation0 [shape = 'u32[]', space=smem, size = 0x4, offset = 0x4, fixed_abs, tag = 'smem constant byte address 0x4 - core index']
  #allocation1 [shape = 'u32[144,128]{1,0:T(1,128)}', space=vmem, size = 0x12000, scoped, tag = 'internal scratch']
  %s0 = inlined_call_operand.hbm [shape: f32[2,4,8,128], index: 0, kind: input, shape index: {}]
  %s1 = inlined_call_operand.hbm [shape: s32[2,1,8,128], index: 1, kind: input, shape index: {}]
  %s2 = inlined_call_operand.hbm [shape: f32[2,2,12,8,128], index: 2, kind: output, shape index: {}]
  %s3 = sld [smem:[#allocation0]]
  $region61: #{tpu_custom_call.1} parent=0
    _
  %s5 = ssub.s32 1, %s3
  %s6 = scalar_select 0, %s5, %s3
  $region1: #{tpu_custom_call.1} parent=0
    #allocation2 [shape = 'u8[32768]{0}', space=vmem, size = 0x8000, scoped, tag = 'input window, operand 0']
    #allocation3 [shape = 's32[2]{0}', space=sflag, size = 0x8, scoped, tag = 'scoped memory for tpu_custom_call.1']
    #allocation4 [shape = 's32[2]{0}', space=sflag, size = 0x8, scoped, tag = 'scoped memory for tpu_custom_call.1']
    #allocation5 [shape = 'u8[8192]{0}', space=vmem, size = 0x2000, scoped, tag = 'input window, operand 1']
    #allocation6 [shape = 's32[2]{0}', space=sflag, size = 0x8, scoped, tag = 'scoped memory for tpu_custom_call.1']
    #allocation7 [shape = 'u8[98304]{0}', space=vmem, size = 0x18000, scoped, tag = 'output window, operand 0']
    %7 = vsyncpa [#allocation3], 0
    %s8 = scalar_lea.sflag [#allocation3], 1
    %9 = vsyncpa %s8, 0
    %10 = vsyncpa [#allocation6], 0
    %s11 = scalar_lea.sflag [#allocation6], 1
    %12 = vsyncpa %s11, 0
    %13 = vsyncpa [#allocation4], 0
    %s14 = scalar_lea.sflag [#allocation4], 1
    %15 = vsyncpa %s14, 0
    loop: start=0, step=1, limit=6
    $region2: #{tpu_custom_call.1} parent=1 // loop_pre_header
      _
    $region3: #{tpu_custom_call.1} parent=1 // loop_header
      %s17 = sphi 0, %s21
      %p18 = scmp.ge.s32.totalorder %s17, 6
      %s24 = sphi 0, %s43
      %s25 = sphi 0, %s39
      %s26 = sphi 0, %s35
      %s27 = sphi 0, %s24
      %s28 = sphi 0, %s25
      %s29 = sphi 0, %s26
      %s30 = sphi 0, %s27
      %s31 = sphi 0, %s28
      %s32 = sphi 0, %s29
      %s54 = sphi 0, %s56
      %s57 = sphi 0, %s54
      %s58 = sphi 0, %s57
      %s74 = sphi 0, %s58
      %s88 = sphi 0, %s90
      %s91 = sphi 0, %s88
      %s92 = sphi 0, %s91
      %s108 = sphi 0, %s92
      %s116 = sphi 0, %s118
      %s119 = sphi 0, %s116
      %s120 = sphi 0, %s119
      %s136 = sphi 0, %s120
    $region4: #{tpu_custom_call.1} parent=1 // loop_header_branch
      %20 = sbr.rel (%p18) target = $region8
    $region5: #{tpu_custom_call.1} parent=1 // loop_body
      %s22 = ssub.s32 %s17, 1
      %s23 = ssub.s32 %s17, 2
      %s33 = sadd.s32 1, %s26
      %p34 = scmp.ge.s32.totalorder %s33, 1
      %s35 = scalar_select %p34, 0, %s33
      %s36 = sadd.s32 1, %s25
      %s37 = scalar_select %p34, %s36, %s25
      %p38 = scmp.ge.s32.totalorder %s37, 2
      %s39 = scalar_select %p38, 0, %s37
      %s40 = sadd.s32 1, %s24
      %s41 = scalar_select %p38, %s40, %s24
      %p42 = scmp.ge.s32.totalorder %s41, 2
      %s43 = scalar_select %p42, 0, %s41
      %s44 = sadd.s32 %s24, %s26
      %p45 = scmp.lt.s32.totalorder %s44, 0
      %s46 = scalar_select %p45, %s44, 0
      %s47 = sadd.s32 %s43, %s35
      %p48 = scmp.lt.s32.totalorder %s47, 0
      %s49 = scalar_select %p48, %s47, 0
      %s50 = ssub.s32 %s25, %s39
      %s51 = ssub.s32 %s46, %s49
      %s52 = sor.u32 %s50, %s51
      %p53 = scmp.eq.s32.totalorder %s52, 0
      %s55 = sadd.s32 %s54, 1
      %s56 = scalar_select %p53, %s54, %s55
      %p59 = pneg %p53
      %p60 = scmp.eq.s32.totalorder %s17, 3
      %p61 = por %p59, %p60
      %p62 = scmp.ne.s32.totalorder %s54, %s57
      %p63 = scmp.eq.s32.totalorder %s17, 0
      %p64 = por %p62, %p63
      %p65 = scmp.ne.s32.totalorder %s54, %s57
      %p66 = scmp.eq.s32.totalorder %s22, 3
      %p67 = por %p65, %p66
      %p68 = scmp.ne.s32.totalorder %s57, %s58
      %p69 = scmp.eq.s32.totalorder %s22, 0
      %p70 = por %p68, %p69
      %p71 = scmp.ne.s32.totalorder %s57, %s58
      %p72 = scmp.eq.s32.totalorder %s23, 3
      %p73 = por %p71, %p72
      %p75 = scmp.ne.s32.totalorder %s58, %s74
      %p76 = scmp.eq.s32.totalorder %s23, 0
      %p77 = por %p75, %p76
      %s78 = sadd.s32 %s24, %s26
      %p79 = scmp.lt.s32.totalorder %s78, 0
      %s80 = scalar_select %p79, %s78, 0
      %s81 = sadd.s32 %s43, %s35
      %p82 = scmp.lt.s32.totalorder %s81, 0
      %s83 = scalar_select %p82, %s81, 0
      %s84 = ssub.s32 %s25, %s39
      %s85 = ssub.s32 %s80, %s83
      %s86 = sor.u32 %s84, %s85
      %p87 = scmp.eq.s32.totalorder %s86, 0
      %s89 = sadd.s32 %s88, 1
      %s90 = scalar_select %p87, %s88, %s89
      %p93 = pneg %p87
      %p94 = scmp.eq.s32.totalorder %s17, 3
      %p95 = por %p93, %p94
      %p96 = scmp.ne.s32.totalorder %s88, %s91
      %p97 = scmp.eq.s32.totalorder %s17, 0
      %p98 = por %p96, %p97
      %p99 = scmp.ne.s32.totalorder %s88, %s91
      %p100 = scmp.eq.s32.totalorder %s22, 3
      %p101 = por %p99, %p100
      %p102 = scmp.ne.s32.totalorder %s91, %s92
      %p103 = scmp.eq.s32.totalorder %s22, 0
      %p104 = por %p102, %p103
      %p105 = scmp.ne.s32.totalorder %s91, %s92
      %p106 = scmp.eq.s32.totalorder %s23, 3
      %p107 = por %p105, %p106
      %p109 = scmp.ne.s32.totalorder %s92, %s108
      %p110 = scmp.eq.s32.totalorder %s23, 0
      %p111 = por %p109, %p110
      %s112 = ssub.s32 %s24, %s43
      %s113 = ssub.s32 %s25, %s39
      %s114 = sor.u32 %s112, %s113
      %p115 = scmp.eq.s32.totalorder %s114, 0
      %s117 = sadd.s32 %s116, 1
      %s118 = scalar_select %p115, %s116, %s117
      %p121 = pneg %p115
      %p122 = scmp.eq.s32.totalorder %s17, 3
      %p123 = por %p121, %p122
      %p124 = scmp.ne.s32.totalorder %s116, %s119
      %p125 = scmp.eq.s32.totalorder %s17, 0
      %p126 = por %p124, %p125
      %p127 = scmp.ne.s32.totalorder %s116, %s119
      %p128 = scmp.eq.s32.totalorder %s22, 3
      %p129 = por %p127, %p128
      %p130 = scmp.ne.s32.totalorder %s119, %s120
      %p131 = scmp.eq.s32.totalorder %s22, 0
      %p132 = por %p130, %p131
      %p133 = scmp.ne.s32.totalorder %s119, %s120
      %p134 = scmp.eq.s32.totalorder %s23, 3
      %p135 = por %p133, %p134
      %p137 = scmp.ne.s32.totalorder %s120, %s136
      %p138 = scmp.eq.s32.totalorder %s23, 0
      %p139 = por %p137, %p138
      %p140 = scmp.le.s32.totalorder 1, %s17
      %p141 = scmp.lt.s32.totalorder %s17, 5
      %p142 = pnand %p140, %p141
      %p143 = pneg %p142
      // Predicated region
      $region9: #{tpu_custom_call.1} parent=5 // pred_check
        _
      $region10: #{tpu_custom_call.1} parent=5 // pred_check_branch
        %145 = sbr.rel (%p142) target = $region12
      $region11: #{tpu_custom_call.1} parent=5 // pred_region
        %s146 = ssub.s32 %s17, 1
      $region12: #{tpu_custom_call.1} parent=5 // pred_fallthru
        _
      %p147 = scmp.lt.s32.totalorder %s17, 4
      // Predicated region
      $region13: #{tpu_custom_call.1} parent=5 // pred_check
        %p148 = pneg %p147
      $region14: #{tpu_custom_call.1} parent=5 // pred_check_branch
        %150 = sbr.rel (%p148) target = $region16
      $region15: #{tpu_custom_call.1} parent=5 // pred_region
        // Predicated region
        $region17: #{tpu_custom_call.1} parent=15 // pred_check
          %p151 = pneg %p64
        $region18: #{tpu_custom_call.1} parent=15 // pred_check_branch
          %153 = sbr.rel (%p151) target = $region20
        $region19: #{tpu_custom_call.1} parent=15 // pred_region
          %s154 = sand.u32 %s54, 1
          %s155 = scalar_lea.sflag [#allocation3], %s154
          %s156 = sand.u32 %s54, 1
          %s157 = smul.addr %s156, 32
          %s158 = scalar_lea.vmem [#allocation2], %s157
          %s159 = sadd.s32 %s24, %s26
          %p160 = scmp.lt.s32.totalorder %s159, 0
          %s161 = scalar_select %p160, %s159, 0
          %s163 = ssub.s32 512, 512
          %164 = vsyncadd %s155, %s163
          %s165 = smul.addr %s25, 4
          %s166 = sadd.s32 %s161, %s165
          %s167 = smul.addr %s166, 128
          %s168 = scalar_lea.hbm %s0, %s167
          %s169 = sshll.u32 %s158, 4
          %s170 = int_to_ptr.vmem [resolvable:$true] %s169
          %175 = dma.hbm_to_vmem [thread:$0]  %s168, 512, %s170, %s155, 128, 128, 8
        $region20: #{tpu_custom_call.1} parent=15 // pred_fallthru
          _
        // Predicated region
        $region21: #{tpu_custom_call.1} parent=15 // pred_check
          %p176 = pneg %p98
        $region22: #{tpu_custom_call.1} parent=15 // pred_check_branch
          %178 = sbr.rel (%p176) target = $region24
        $region23: #{tpu_custom_call.1} parent=15 // pred_region
          %s179 = sand.u32 %s88, 1
          %s180 = scalar_lea.sflag [#allocation6], %s179
          %s181 = sand.u32 %s88, 1
          %s182 = smul.addr %s181, 8
          %s183 = scalar_lea.vmem [#allocation5], %s182
          %s184 = sadd.s32 %s24, %s26
          %p185 = scmp.lt.s32.totalorder %s184, 0
          %s186 = scalar_select %p185, %s184, 0
          %s188 = ssub.s32 128, 128
          %189 = vsyncadd %s180, %s188
          %s190 = sadd.s32 %s186, %s25
          %s191 = smul.addr %s190, 128
          %s192 = scalar_lea.hbm %s1, %s191
          %s194 = sshll.u32 %s183, 4
          %s195 = int_to_ptr.vmem [resolvable:$true] %s194
          %197 = dma.hbm_to_vmem [thread:$0]  %s192, 128, %s195, %s180
        $region24: #{tpu_custom_call.1} parent=15 // pred_fallthru
          _
      $region16: #{tpu_custom_call.1} parent=5 // pred_fallthru
        _
      %p198 = scmp.le.s32.totalorder 1, %s17
      %p199 = scmp.lt.s32.totalorder %s17, 5
      %p200 = pnand %p198, %p199
      %p201 = pneg %p200
      // Predicated region
      $region25: #{tpu_custom_call.1} parent=5 // pred_check
        _
      $region26: #{tpu_custom_call.1} parent=5 // pred_check_branch
        %203 = sbr.rel (%p200) target = $region28
      $region27: #{tpu_custom_call.1} parent=5 // pred_region
        %s204 = ssub.s32 %s17, 1
        %s205 = sand.u32 %s57, 1
        %s206 = scalar_lea.sflag [#allocation3], %s205
        %s207 = sand.u32 %s57, 1
        %s208 = smul.addr %s207, 32
        %s209 = scalar_lea.vmem [#allocation2], %s208
        // Predicated region
        $region29: #{tpu_custom_call.1} parent=27 // pred_check
          %p210 = pneg %p70
        $region30: #{tpu_custom_call.1} parent=27 // pred_check_branch
          %212 = sbr.rel (%p210) target = $region32
        $region31: #{tpu_custom_call.1} parent=27 // pred_region
          %213 = dma.done %s206, 512
        $region32: #{tpu_custom_call.1} parent=27 // pred_fallthru
          _
        %s214 = sand.u32 %s91, 1
        %s215 = scalar_lea.sflag [#allocation6], %s214
        %s216 = sand.u32 %s91, 1
        %s217 = smul.addr %s216, 8
        %s218 = scalar_lea.vmem [#allocation5], %s217
        // Predicated region
        $region33: #{tpu_custom_call.1} parent=27 // pred_check
          %p219 = pneg %p104
        $region34: #{tpu_custom_call.1} parent=27 // pred_check_branch
          %221 = sbr.rel (%p219) target = $region36
        $region35: #{tpu_custom_call.1} parent=27 // pred_region
          %222 = dma.done %s215, 128
        $region36: #{tpu_custom_call.1} parent=27 // pred_fallthru
          _
        %s223 = sand.u32 %s57, 1
        %s224 = scalar_lea.sflag [#allocation3], %s223
        %s225 = sand.u32 %s57, 1
        %s226 = smul.addr %s225, 32
        %s227 = scalar_lea.vmem [#allocation2], %s226
        %p228 = pneg %p70
        %p229 = pneg %p67
        %s230 = sand.u32 %s91, 1
        %s231 = scalar_lea.sflag [#allocation6], %s230
        %s232 = sand.u32 %s91, 1
        %s233 = smul.addr %s232, 8
        %s234 = scalar_lea.vmem [#allocation5], %s233
        %p235 = pneg %p104
        %p236 = pneg %p101
        %p237 = pneg %p132
        %p238 = pneg %p129
        %s239 = sand.u32 %s119, 1
        %s240 = scalar_lea.sflag [#allocation4], %s239
        %s241 = sand.u32 %s119, 1
        %s242 = smul.addr %s241, 96
        %s243 = scalar_lea.vmem [#allocation7], %s242
        %s244 = sadd.s32 %s27, %s29
        %p245 = scmp.lt.s32.totalorder %s244, 0
        %s246 = scalar_select %p245, %s244, 0
        %s247 = sadd.s32 %s27, %s29
        %p248 = scmp.lt.s32.totalorder %s247, 0
        %s249 = scalar_select %p248, %s247, 0
        %p250 = scmp.eq.s32.totalorder %s29, 0
        // Predicated region
        $region37: #{tpu_custom_call.1} parent=27 // pred_check
          %p251 = pneg %p250
        $region38: #{tpu_custom_call.1} parent=27 // pred_check_branch
          %253 = sbr.rel (%p251) target = $region40
        $region39: #{tpu_custom_call.1} parent=27 // pred_region
          %254 = vst [vmem:[%s243] sm:$0xff] 0.0
          %255 = vst [vmem:[%s243 + $0x8] sm:$0xff] 0.0
          %256 = vst [vmem:[%s243 + $0x10] sm:$0xff] 0.0
          %257 = vst [vmem:[%s243 + $0x18] sm:$0xff] 0.0
          %258 = vst [vmem:[%s243 + $0x20] sm:$0xff] 0.0
          %259 = vst [vmem:[%s243 + $0x28] sm:$0xff] 0.0
          %260 = vst [vmem:[%s243 + $0x30] sm:$0xff] 0.0
          %261 = vst [vmem:[%s243 + $0x38] sm:$0xff] 0.0
          %262 = vst [vmem:[%s243 + $0x40] sm:$0xff] 0.0
          %263 = vst [vmem:[%s243 + $0x48] sm:$0xff] 0.0
          %264 = vst [vmem:[%s243 + $0x50] sm:$0xff] 0.0
          %265 = vst [vmem:[%s243 + $0x58] sm:$0xff] 0.0
        $region40: #{tpu_custom_call.1} parent=27 // pred_fallthru
          _
        %s266 = sadd.s32 %s27, %s29
        %s267 = smul.u32 %s266, 1024
        %s268 = sadd.s32 %s267, 1024
        %p269 = scmp.le.s32.totalorder %s268, 256
        // Predicated region
        $region41: #{tpu_custom_call.1} parent=27 // pred_check
          %p270 = pneg %p269
        $region42: #{tpu_custom_call.1} parent=27 // pred_check_branch
          %272 = sbr.rel (%p270) target = $region44
        $region43: #{tpu_custom_call.1} parent=27 // pred_region
          %v273 = vld [vmem:[%s218] sm:$0xff]
          %v274 = vld [vmem:[%s209] sm:$0xff]
          %vm275 = vcmp.eq.s32.totalorder %v273, 0
          %v276 = vsel %vm275, %v274, 0.0
          %v277 = vsel %vm275, 1.0, 0.0
          %v278 = vld [vmem:[%s243] sm:$0xff]
          %v279 = vadd.f32 %v276, 0.0
          %v280 = vadd.f32 %v278, %v279
          %281 = vst [vmem:[%s243] sm:$0xff] %v280
          %s282 = scalar_lea.vmem %s243, 32 [#allocation7]
          %v283 = vld [vmem:[%s282] sm:$0xff]
          %v284 = vadd.f32 %v274, 0.0
          %v285 = vadd.f32 %v283, %v284
          %286 = vst [vmem:[%s282] sm:$0xff] %v285
          %s287 = scalar_lea.vmem %s243, 64 [#allocation7]
          %v288 = vld [vmem:[%s287] sm:$0xff]
          %v289 = vadd.f32 %v277, 0.0
          %v290 = vadd.f32 %v288, %v289
          %291 = vst [vmem:[%s287] sm:$0xff] %v290
          %s292 = sadd.s32 0, 8
          %s293 = scalar_lea.vmem %s209, %s292 [#allocation2]
          %v294 = vld [vmem:[%s293] sm:$0xff]
          %vm295 = vcmp.eq.s32.totalorder %v273, 1
          %v296 = vsel %vm295, %v294, 0.0
          %v297 = vsel %vm295, 1.0, 0.0
          %s298 = scalar_lea.vmem %s243, 8 [#allocation7]
          %v299 = vld [vmem:[%s298] sm:$0xff]
          %v300 = vadd.f32 %v296, 0.0
          %v301 = vadd.f32 %v299, %v300
          %302 = vst [vmem:[%s298] sm:$0xff] %v301
          %s303 = scalar_lea.vmem %s243, 40 [#allocation7]
          %v304 = vld [vmem:[%s303] sm:$0xff]
          %v305 = vadd.f32 %v294, 0.0
          %v306 = vadd.f32 %v304, %v305
          %307 = vst [vmem:[%s303] sm:$0xff] %v306
          %s308 = scalar_lea.vmem %s243, 72 [#allocation7]
          %v309 = vld [vmem:[%s308] sm:$0xff]
          %v310 = vadd.f32 %v297, 0.0
          %v311 = vadd.f32 %v309, %v310
          %312 = vst [vmem:[%s308] sm:$0xff] %v311
          %s313 = sadd.s32 0, 16
          %s314 = scalar_lea.vmem %s209, %s313 [#allocation2]
          %v315 = vld [vmem:[%s314] sm:$0xff]
          %vm316 = vcmp.eq.s32.totalorder %v273, 2
          %v317 = vsel %vm316, %v315, 0.0
          %v318 = vsel %vm316, 1.0, 0.0
          %s319 = scalar_lea.vmem %s243, 16 [#allocation7]
          %v320 = vld [vmem:[%s319] sm:$0xff]
          %v321 = vadd.f32 %v317, 0.0
          %v322 = vadd.f32 %v320, %v321
          %323 = vst [vmem:[%s319] sm:$0xff] %v322
          %s324 = scalar_lea.vmem %s243, 48 [#allocation7]
          %v325 = vld [vmem:[%s324] sm:$0xff]
          %v326 = vadd.f32 %v315, 0.0
          %v327 = vadd.f32 %v325, %v326
          %328 = vst [vmem:[%s324] sm:$0xff] %v327
          %s329 = scalar_lea.vmem %s243, 80 [#allocation7]
          %v330 = vld [vmem:[%s329] sm:$0xff]
          %v331 = vadd.f32 %v318, 0.0
          %v332 = vadd.f32 %v330, %v331
          %333 = vst [vmem:[%s329] sm:$0xff] %v332
          %s334 = sadd.s32 0, 24
          %s335 = scalar_lea.vmem %s209, %s334 [#allocation2]
          %v336 = vld [vmem:[%s335] sm:$0xff]
          %vm337 = vcmp.eq.s32.totalorder %v273, 3
          %v338 = vsel %vm337, %v336, 0.0
          %v339 = vsel %vm337, 1.0, 0.0
          %s340 = scalar_lea.vmem %s243, 24 [#allocation7]
          %v341 = vld [vmem:[%s340] sm:$0xff]
          %v342 = vadd.f32 %v338, 0.0
          %v343 = vadd.f32 %v341, %v342
          %344 = vst [vmem:[%s340] sm:$0xff] %v343
          %s345 = scalar_lea.vmem %s243, 56 [#allocation7]
          %v346 = vld [vmem:[%s345] sm:$0xff]
          %v347 = vadd.f32 %v336, 0.0
          %v348 = vadd.f32 %v346, %v347
          %349 = vst [vmem:[%s345] sm:$0xff] %v348
          %s350 = scalar_lea.vmem %s243, 88 [#allocation7]
          %v351 = vld [vmem:[%s350] sm:$0xff]
          %v352 = vadd.f32 %v339, 0.0
          %v353 = vadd.f32 %v351, %v352
          %354 = vst [vmem:[%s350] sm:$0xff] %v353
        $region44: #{tpu_custom_call.1} parent=27 // pred_fallthru
          _
        %p355 = scmp.gt.s32.totalorder %s268, 256
        // Predicated region
        $region45: #{tpu_custom_call.1} parent=27 // pred_check
          %p356 = pneg %p355
        $region46: #{tpu_custom_call.1} parent=27 // pred_check_branch
          %358 = sbr.rel (%p356) target = $region48
        $region47: #{tpu_custom_call.1} parent=27 // pred_region
          %v359 = vld [vmem:[%s218] sm:$0xff]
          %v360 = vlaneseq
          %v361 = vshrl.u32 %v360, 7
          %v362 = vlaneseq
          %v363 = vand.u32 %v362, 127
          %v364 = vstv 0
          %v365 = vadd.s32 %v364, %v361
          %v366 = vmul.u32 %v365, 128
          %v367 = vstv %s267
          %v368 = vadd.s32 %v367, %v366
          %v369 = vadd.s32 %v368, %v363
          %vm370 = vcmp.lt.s32.totalorder %v369, 256
          %v371 = vld [vmem:[%s209] sm:$0xff]
          %vm372 = vcmp.eq.s32.totalorder %v359, 0
          %vm373 = vmand %vm372, %vm370
          %v374 = vsel %vm370, %v371, 0.0
          %v375 = vsel %vm373, %v371, 0.0
          %v376 = vsel %vm373, 1.0, 0.0
          %v377 = vld [vmem:[%s243] sm:$0xff]
          %v378 = vadd.f32 %v375, 0.0
          %v379 = vadd.f32 %v377, %v378
          %380 = vst [vmem:[%s243] sm:$0xff] %v379
          %s381 = scalar_lea.vmem %s243, 32 [#allocation7]
          %v382 = vld [vmem:[%s381] sm:$0xff]
          %v383 = vadd.f32 %v374, 0.0
          %v384 = vadd.f32 %v382, %v383
          %385 = vst [vmem:[%s381] sm:$0xff] %v384
          %s386 = scalar_lea.vmem %s243, 64 [#allocation7]
          %v387 = vld [vmem:[%s386] sm:$0xff]
          %v388 = vadd.f32 %v376, 0.0
          %v389 = vadd.f32 %v387, %v388
          %390 = vst [vmem:[%s386] sm:$0xff] %v389
          %s391 = sadd.s32 0, 8
          %s392 = scalar_lea.vmem %s209, %s391 [#allocation2]
          %v393 = vld [vmem:[%s392] sm:$0xff]
          %vm394 = vcmp.eq.s32.totalorder %v359, 1
          %vm395 = vmand %vm394, %vm370
          %v396 = vsel %vm370, %v393, 0.0
          %v397 = vsel %vm395, %v393, 0.0
          %v398 = vsel %vm395, 1.0, 0.0
          %s399 = scalar_lea.vmem %s243, 8 [#allocation7]
          %v400 = vld [vmem:[%s399] sm:$0xff]
          %v401 = vadd.f32 %v397, 0.0
          %v402 = vadd.f32 %v400, %v401
          %403 = vst [vmem:[%s399] sm:$0xff] %v402
          %s404 = scalar_lea.vmem %s243, 40 [#allocation7]
          %v405 = vld [vmem:[%s404] sm:$0xff]
          %v406 = vadd.f32 %v396, 0.0
          %v407 = vadd.f32 %v405, %v406
          %408 = vst [vmem:[%s404] sm:$0xff] %v407
          %s409 = scalar_lea.vmem %s243, 72 [#allocation7]
          %v410 = vld [vmem:[%s409] sm:$0xff]
          %v411 = vadd.f32 %v398, 0.0
          %v412 = vadd.f32 %v410, %v411
          %413 = vst [vmem:[%s409] sm:$0xff] %v412
          %s414 = sadd.s32 0, 16
          %s415 = scalar_lea.vmem %s209, %s414 [#allocation2]
          %v416 = vld [vmem:[%s415] sm:$0xff]
          %vm417 = vcmp.eq.s32.totalorder %v359, 2
          %vm418 = vmand %vm417, %vm370
          %v419 = vsel %vm370, %v416, 0.0
          %v420 = vsel %vm418, %v416, 0.0
          %v421 = vsel %vm418, 1.0, 0.0
          %s422 = scalar_lea.vmem %s243, 16 [#allocation7]
          %v423 = vld [vmem:[%s422] sm:$0xff]
          %v424 = vadd.f32 %v420, 0.0
          %v425 = vadd.f32 %v423, %v424
          %426 = vst [vmem:[%s422] sm:$0xff] %v425
          %s427 = scalar_lea.vmem %s243, 48 [#allocation7]
          %v428 = vld [vmem:[%s427] sm:$0xff]
          %v429 = vadd.f32 %v419, 0.0
          %v430 = vadd.f32 %v428, %v429
          %431 = vst [vmem:[%s427] sm:$0xff] %v430
          %s432 = scalar_lea.vmem %s243, 80 [#allocation7]
          %v433 = vld [vmem:[%s432] sm:$0xff]
          %v434 = vadd.f32 %v421, 0.0
          %v435 = vadd.f32 %v433, %v434
          %436 = vst [vmem:[%s432] sm:$0xff] %v435
          %s437 = sadd.s32 0, 24
          %s438 = scalar_lea.vmem %s209, %s437 [#allocation2]
          %v439 = vld [vmem:[%s438] sm:$0xff]
          %vm440 = vcmp.eq.s32.totalorder %v359, 3
          %vm441 = vmand %vm440, %vm370
          %v442 = vsel %vm370, %v439, 0.0
          %v443 = vsel %vm441, %v439, 0.0
          %v444 = vsel %vm441, 1.0, 0.0
          %s445 = scalar_lea.vmem %s243, 24 [#allocation7]
          %v446 = vld [vmem:[%s445] sm:$0xff]
          %v447 = vadd.f32 %v443, 0.0
          %v448 = vadd.f32 %v446, %v447
          %449 = vst [vmem:[%s445] sm:$0xff] %v448
          %s450 = scalar_lea.vmem %s243, 56 [#allocation7]
          %v451 = vld [vmem:[%s450] sm:$0xff]
          %v452 = vadd.f32 %v442, 0.0
          %v453 = vadd.f32 %v451, %v452
          %454 = vst [vmem:[%s450] sm:$0xff] %v453
          %s455 = scalar_lea.vmem %s243, 88 [#allocation7]
          %v456 = vld [vmem:[%s455] sm:$0xff]
          %v457 = vadd.f32 %v444, 0.0
          %v458 = vadd.f32 %v456, %v457
          %459 = vst [vmem:[%s455] sm:$0xff] %v458
        $region48: #{tpu_custom_call.1} parent=27 // pred_fallthru
          _
        %s460 = sand.u32 %s119, 1
        %s461 = scalar_lea.sflag [#allocation4], %s460
        %s462 = sand.u32 %s119, 1
        %s463 = smul.addr %s462, 96
        %s464 = scalar_lea.vmem [#allocation7], %s463
        // Predicated region
        $region49: #{tpu_custom_call.1} parent=27 // pred_check
          %p465 = pneg %p129
        $region50: #{tpu_custom_call.1} parent=27 // pred_check_branch
          %467 = sbr.rel (%p465) target = $region52
        $region51: #{tpu_custom_call.1} parent=27 // pred_region
          %s469 = ssub.s32 1536, 1536
          %470 = vsyncadd %s461, %s469
          %s471 = smul.addr %s28, 12
          %s472 = smul.addr %s27, 24
          %s473 = sadd.s32 %s471, %s472
          %s474 = smul.addr %s473, 128
          %s475 = scalar_lea.hbm %s2, %s474
          %s476 = sshll.u32 %s464, 4
          %s477 = int_to_ptr.vmem [resolvable:$true] %s476
          %482 = dma.vmem_to_hbm [thread:$0]  %s477, 1536, %s475, %s461, 128, 128, 8
        $region52: #{tpu_custom_call.1} parent=27 // pred_fallthru
          _
      $region28: #{tpu_custom_call.1} parent=5 // pred_fallthru
        _
      %p483 = scmp.le.s32.totalorder 2, %s17
      // Predicated region
      $region53: #{tpu_custom_call.1} parent=5 // pred_check
        %p484 = pneg %p483
      $region54: #{tpu_custom_call.1} parent=5 // pred_check_branch
        %486 = sbr.rel (%p484) target = $region56
      $region55: #{tpu_custom_call.1} parent=5 // pred_region
        %s487 = ssub.s32 %s17, 2
        // Predicated region
        $region57: #{tpu_custom_call.1} parent=55 // pred_check
          %p488 = pneg %p135
        $region58: #{tpu_custom_call.1} parent=55 // pred_check_branch
          %490 = sbr.rel (%p488) target = $region60
        $region59: #{tpu_custom_call.1} parent=55 // pred_region
          %s491 = sand.u32 %s120, 1
          %s492 = scalar_lea.sflag [#allocation4], %s491
          %s493 = sand.u32 %s120, 1
          %s494 = smul.addr %s493, 96
          %s495 = scalar_lea.vmem [#allocation7], %s494
          %496 = dma.done %s492, 1536
        $region60: #{tpu_custom_call.1} parent=55 // pred_fallthru
          _
      $region56: #{tpu_custom_call.1} parent=5 // pred_fallthru
        _
    $region6: #{tpu_custom_call.1} parent=1 // loop_footer
      %s21 = sadd.s32 1, %s17
    $region7: #{tpu_custom_call.1} parent=1 // loop_footer_branch
      %16 = sbr.rel target = $region3
    $region8: #{tpu_custom_call.1} parent=1 // loop_exit
      _
    %497 = vsyncpa [#allocation3], 1
    %s498 = scalar_lea.sflag [#allocation3], 1
    %499 = vsyncpa %s498, 1
    %500 = vsyncpa [#allocation6], 1
    %s501 = scalar_lea.sflag [#allocation6], 1
    %502 = vsyncpa %s501, 1
    %503 = vsyncpa [#allocation4], 1
    %s504 = scalar_lea.sflag [#allocation4], 1
    %505 = vsyncpa %s504, 1

</llo_original>
